<compile_context>
chip_gen: v5e
topology: v5e:2x2
jax: 0.10.0
libtpu: 0.0.40
codegen_flags: <defaults>
</compile_context>

<pallas_src>
import functools
import math

import jax
import jax.numpy as jnp
from jax import lax
from jax.experimental import pallas as pl
from jax.experimental.pallas import tpu as pltpu


def _supcon_row_kernel(cf_row_ref, cft_ref, lab_row_ref, lab_col_ref,
                       d_full_ref, l_row_ref, out_ref,
                       *, temperature, base_temperature, alpha,
                       n_real, n_pad, n_classes, tm):
    i = pl.program_id(0)
    row_start = pl.multiple_of(i * tm, tm)

    # anchor_dot_contrast / temperature: rows are pre-scaled by 1/T in the
    # wrapper, so one bf16 MXU matmul gives the scaled logits directly.
    adc = jnp.dot(cf_row_ref[...], cft_ref[...],
                  preferred_element_type=jnp.float32)            # [TM, Npad] f32

    g_rows = row_start + lax.broadcasted_iota(jnp.int32, (tm, 1), 0)   # [TM, 1]
    g_cols = lax.broadcasted_iota(jnp.int32, (1, n_pad), 1)            # [1, Npad]
    if n_pad > n_real:                                   # static: only if padded
        valid_col = g_cols < n_real
        off = jnp.logical_and(g_rows != g_cols, valid_col)
        adc = jnp.where(valid_col, adc, -jnp.inf)        # pads never win max/sums
    else:
        off = g_rows != g_cols                           # off-diagonal mask

    row_max = jnp.max(adc, axis=1, keepdims=True)
    logits = adc - row_max                               # <= 0 on real columns

    # One exp over the slab; exp(-logits) via EUP approximate reciprocal.
    e = jnp.exp(logits)
    inv_e = pl.reciprocal(e, approx=True)
    label_logits = jnp.where(off, inv_e, 0.0)            # exp(-logits) * off-diag

    # A_hat^-1 row normalization; (P @ D)[rows] = D[rows] - ll_norm @ D
    # (P, eye never materialized).  P@D runs in bf16 on the MXU.
    rowsum = jnp.sum(label_logits, axis=1, keepdims=True)
    ll_norm = label_logits * pl.reciprocal(rowsum, approx=True)
    pd = jnp.dot(ll_norm.astype(d_full_ref.dtype), d_full_ref[...],
                 preferred_element_type=jnp.float32)     # [TM, Cpad]

    # Row slab of D comes from the already-resident operand (no duplicate DMA).
    d_row = d_full_ref[pl.ds(row_start, tm), :].astype(jnp.float32)
    dh = alpha * (d_row - pd) + (1.0 - alpha) * l_row_ref[...]

    # Row softmax over the real classes (pad lanes -> -inf -> 0).
    c_cols = lax.broadcasted_iota(jnp.int32, (1, dh.shape[-1]), 1)
    dh = jnp.where(c_cols < n_classes, dh, -jnp.inf)
    dh = dh - jnp.max(dh, axis=1, keepdims=True)
    dh_exp = jnp.exp(dh)
    dh_sm = dh_exp * pl.reciprocal(jnp.sum(dh_exp, axis=1, keepdims=True),
                                   approx=True)

    # SupCon per-row loss; contrastive mask rebuilt from labels, boolean selects
    # only (no float mask multiply).
    sum_exp = jnp.sum(jnp.where(off, e, 0.0), axis=1, keepdims=True)
    log_prob = logits - jnp.log(sum_exp)
    pos = jnp.logical_and(lab_row_ref[...] == lab_col_ref[...], off)
    num = jnp.sum(jnp.where(pos, log_prob, 0.0), axis=1, keepdims=True)
    cnt = jnp.sum(jnp.where(pos, 1.0, 0.0), axis=1, keepdims=True)
    loss_row = (-(temperature / base_temperature)) * num * \
        pl.reciprocal(cnt + 1e-5, approx=True)                        # [TM, 1]

    # Single lane-dense store: D_hat in lanes [0, C), per-row loss in lane C.
    out_ref[...] = jnp.where(c_cols == n_classes, loss_row, dh_sm)


def _round_up(x, m):
    return ((x + m - 1) // m) * m


def _select_tile(n, fd, c_pad, mm_bytes, user_tm=None):
    """Generation-aware TM / N padding / VMEM-limit selection."""
    vmem_cap = 64 * 1024 * 1024                       # conservative (v7x per-core)
    try:
        vmem_cap = int(pltpu.get_tpu_info().vmem_capacity_bytes)
    except Exception:
        pass
    kind = ""
    try:
        kind = jax.devices()[0].device_kind.lower()
    except Exception:
        pass

    if "v5" in kind and ("lite" in kind or "5e" in kind):
        tm_cap = 128          # v5e: 4x(128x128) MXU -> TM=128 already fills M
    elif vmem_cap >= 100 * 1024 * 1024:
        tm_cap = 512          # v6e-class: 2x(256x256) MXU + 128 MiB VMEM
    else:
        tm_cap = 256          # v7x-class (64 MiB VMEM) / unknown
    budget = int(vmem_cap * 0.70)                     # headroom for Mosaic scratch

    n_pad = _round_up(max(n, 8), 128)                 # lane-dense cf^T / slabs

    def vmem_need(t):
        resident = fd * n_pad * mm_bytes + n_pad * 4 + n_pad * c_pad * mm_bytes
        row_io = 2 * (t * fd * mm_bytes + t * 4 + t * c_pad * 4)   # dbl-buffered
        out_io = 2 * t * c_pad * 4
        temps = 8 * t * n_pad * 4 + 2 * t * c_pad * 4
        return resident + row_io + out_io + temps

    if user_tm is not None:
        tm = int(user_tm)
        step = tm * 128 // math.gcd(tm, 128)
        n_pad = _round_up(max(n, 8), step)
    else:
        tm = 8
        for t in (512, 256, 128, 64, 32, 16, 8):
            if t > tm_cap or n_pad % t != 0:
                continue
            if vmem_need(t) <= budget:
                tm = t
                break
        # TODO(synk): for very large N where even single-buffered residents
        # (cf^T + D) overflow VMEM, a second "arbitrary" grid axis over column
        # blocks with online-softmax accumulators is needed; not implemented.

    need = vmem_need(tm)
    vmem_limit = int(min(vmem_cap * 0.85,
                         max(32 * 1024 * 1024, need + 16 * 1024 * 1024)))
    return tm, n_pad, vmem_limit


def supcon_loss(features, labels, D, L, *,
                temperature=0.07, base_temperature=0.07, alpha=0.7,
                tm=None, matmul_dtype=jnp.bfloat16):
    """Pallas TPU SupConLoss.forward (contrast_mode='all', label-derived mask).
    Returns (loss_scalar, D_hat[N, C])."""
    B, V = features.shape[0], features.shape[1]
    feat = jnp.reshape(features, (B, V, -1)).astype(jnp.float32)
    Fd = feat.shape[-1]
    N = B * V
    C = int(D.shape[-1])
    mm_bytes = jnp.dtype(matmul_dtype).itemsize

    # Class dim padded lane-dense, +1 lane (index C) for the per-row loss.
    c_pad = _round_up(C + 1, 128)

    tm, n_pad, vmem_limit = _select_tile(N, Fd, c_pad, mm_bytes, user_tm=tm)
    grid_n = n_pad // tm

    # contrast_feature = cat(unbind(features, 1), 0): view-major rows.
    cf = jnp.transpose(feat, (1, 0, 2)).reshape(N, Fd)
    cf = jnp.pad(cf, ((0, n_pad - N), (0, 0)))
    cf_rows = (cf * (1.0 / float(temperature))).astype(matmul_dtype)  # 1/T folded
    cf_t = cf.astype(matmul_dtype).T                                  # [Fd, Npad]

    labels_full = jnp.tile(jnp.asarray(labels, jnp.int32).reshape(-1), (V,))
    labels_full = jnp.pad(labels_full, (0, n_pad - N), constant_values=-1)
    lab_row = labels_full.reshape(n_pad, 1)
    lab_col = labels_full.reshape(1, n_pad)

    # Reference hard-codes torch.cat((D, D), 0) (only shape-consistent for
    # V == 2); tiling V copies is identical for V == 2.
    d_full = jnp.concatenate([jnp.asarray(D, jnp.float32)] * V, axis=0)
    l_full = jnp.concatenate([jnp.asarray(L, jnp.float32)] * V, axis=0)
    d_full = jnp.pad(d_full, ((0, n_pad - N), (0, c_pad - C))).astype(matmul_dtype)
    l_full = jnp.pad(l_full, ((0, n_pad - N), (0, c_pad - C)))

    kernel = functools.partial(
        _supcon_row_kernel,
        temperature=float(temperature), base_temperature=float(base_temperature),
        alpha=float(alpha), n_real=N, n_pad=n_pad, n_classes=C, tm=tm)

    cost = pl.CostEstimate(
        flops=2 * n_pad * n_pad * Fd + 2 * n_pad * n_pad * c_pad + 14 * n_pad * n_pad,
        transcendentals=2 * n_pad * n_pad + n_pad * c_pad,
        bytes_accessed=(2 * n_pad * Fd * mm_bytes + 2 * n_pad * 4
                        + n_pad * c_pad * (mm_bytes + 4) + n_pad * c_pad * 4),
    )

    def _call(single_buffer_residents):
        def const_spec(shape):
            # Grid-invariant operand: keep it single-buffered if supported.
            if single_buffer_residents:
                return pl.BlockSpec(shape, lambda i: (0, 0),
                                    pipeline_mode=pl.Buffered(1))
            return pl.BlockSpec(shape, lambda i: (0, 0))

        in_specs = [
            pl.BlockSpec((tm, Fd), lambda i: (i, 0)),      # cf rows (scaled, bf16)
            const_spec((Fd, n_pad)),                       # cf^T        (resident)
            pl.BlockSpec((tm, 1), lambda i: (i, 0)),       # labels, row block
            const_spec((1, n_pad)),                        # labels cols (resident)
            const_spec((n_pad, c_pad)),                    # D bf16      (resident)
            pl.BlockSpec((tm, c_pad), lambda i: (i, 0)),   # L rows
        ]
        out_specs = pl.BlockSpec((tm, c_pad), lambda i: (i, 0))
        return pl.pallas_call(
            kernel,
            out_shape=jax.ShapeDtypeStruct((n_pad, c_pad), jnp.float32),
            grid=(grid_n,),
            in_specs=in_specs,
            out_specs=out_specs,
            compiler_params=pltpu.CompilerParams(
                dimension_semantics=("parallel",),
                vmem_limit_bytes=vmem_limit),
            cost_estimate=cost,
        )(cf_rows, cf_t, lab_row, lab_col, d_full, l_full)

    if hasattr(pl, "Buffered"):
        try:
            out_pad = _call(True)
        except Exception:
            out_pad = _call(False)     # jax without pipeline_mode / Buffered(1)
    else:
        out_pad = _call(False)

    d_hat = out_pad[:N, :C]
    loss = jnp.mean(out_pad[:N, C])    # == loss.view(anchor_count, bsz).mean()
    return loss, d_hat


def supcon_loss_reference(features, labels, D, L, *, temperature=0.07,
                          base_temperature=0.07, alpha=0.7):
    """Pure-JAX f32 replica of the PyTorch forward (label-derived mask)."""
    B, V = features.shape[0], features.shape[1]
    feat = jnp.reshape(features, (B, V, -1)).astype(jnp.float32)
    N = B * V
    cf = jnp.transpose(feat, (1, 0, 2)).reshape(N, -1)
    adc = jnp.dot(cf, cf.T) / temperature
    logits = adc - jnp.max(adc, axis=1, keepdims=True)
    eye = jnp.eye(N, dtype=jnp.float32)
    off = 1.0 - eye
    label_logits = jnp.exp(-logits) * off
    p_mat = eye - label_logits / jnp.sum(label_logits, axis=1, keepdims=True)
    d2 = jnp.concatenate([jnp.asarray(D, jnp.float32)] * V, axis=0)
    l2 = jnp.concatenate([jnp.asarray(L, jnp.float32)] * V, axis=0)
    dhat = jax.nn.softmax(alpha * (p_mat @ d2) + (1.0 - alpha) * l2, axis=1)
    lab = jnp.tile(jnp.asarray(labels, jnp.int32).reshape(-1), (V,))
    mask = (lab[:, None] == lab[None, :]).astype(jnp.float32) * off
    exp_logits = jnp.exp(logits) * off
    log_prob = logits - jnp.log(jnp.sum(exp_logits, axis=1, keepdims=True))
    mlpp = jnp.sum(mask * log_prob, axis=1) / (jnp.sum(mask, axis=1) + 1e-5)
    loss = jnp.mean(-(temperature / base_temperature) * mlpp)
    return loss, dhat


if __name__ == "__main__":
    key = jax.random.PRNGKey(0)
    k_feat, k_lab, k_d, k_l = jax.random.split(key, 4)

    B, V, Fd, C = 64, 2, 64, 10          # batch, n_views, feature dim, classes
    N = B * V

    features = jax.random.normal(k_feat, (B, V, Fd), dtype=jnp.float32)
    features = features / jnp.linalg.norm(features, axis=-1, keepdims=True)
    labels = jax.random.randint(k_lab, (B,), 0, 4)
    D = jax.nn.softmax(jax.random.normal(k_d, (B, C), dtype=jnp.float32), axis=1)
    L = jax.nn.softmax(jax.random.normal(k_l, (B, C), dtype=jnp.float32), axis=1)

    loss, d_hat = supcon_loss(features, labels, D, L,
                              temperature=0.07, base_temperature=0.07, alpha=0.7)
    loss, d_hat = jax.block_until_ready((loss, d_hat))

    ref_loss, ref_dhat = supcon_loss_reference(
        features, labels, D, L,
        temperature=0.07, base_temperature=0.07, alpha=0.7)

    assert d_hat.shape == (N, C)
    assert bool(jnp.isfinite(loss))
    assert bool(jnp.allclose(loss, ref_loss, rtol=2e-2, atol=2e-2)), (loss, ref_loss)
    assert bool(jnp.allclose(d_hat, ref_dhat, rtol=2e-2, atol=2e-2))
    print("KERNEL_OK")
</pallas_src>

<mosaic_0001>
module attributes {stable_mosaic.version = 11 : i64} {
  func.func @_supcon_row_kernel(%arg0: i32, %arg1: memref<128x64xbf16, #tpu.memory_space<vmem>>, %arg2: memref<64x128xbf16, #tpu.memory_space<vmem>>, %arg3: memref<128x1xi32, #tpu.memory_space<vmem>>, %arg4: memref<1x128xi32, #tpu.memory_space<vmem>>, %arg5: memref<128x128xbf16, #tpu.memory_space<vmem>>, %arg6: memref<128x128xf32, #tpu.memory_space<vmem>>, %arg7: memref<128x128xf32, #tpu.memory_space<vmem>>) attributes {dimension_semantics = [#tpu.dimension_semantics<parallel>], iteration_bounds = array<i64: 1>, scalar_prefetch = 0 : i64, scratch_operands = 0 : i64, tpu.core_type = #tpu.core_type<tc>, window_params = [{transform_indices = @transform_0, window_bounds = array<i64: 128, 64>}, {pipeline_mode = #tpu.pipeline_mode<synchronous>, transform_indices = @transform_1, window_bounds = array<i64: 64, 128>}, {transform_indices = @transform_2, window_bounds = array<i64: 128, 1>}, {pipeline_mode = #tpu.pipeline_mode<synchronous>, transform_indices = @transform_3, window_bounds = array<i64: 1, 128>}, {pipeline_mode = #tpu.pipeline_mode<synchronous>, transform_indices = @transform_4, window_bounds = array<i64: 128, 128>}, {transform_indices = @transform_5, window_bounds = array<i64: 128, 128>}, {transform_indices = @transform_6, window_bounds = array<i64: 128, 128>}]} {
    %c128_i32 = arith.constant 128 : i32
    %0 = arith.muli %arg0, %c128_i32 : i32
    %1 = tpu.assume_multiple %0, 128 : i32
    %c0 = arith.constant 0 : index
    %c0_0 = arith.constant 0 : index
    %2 = vector.load %arg1[%c0, %c0_0] : memref<128x64xbf16, #tpu.memory_space<vmem>>, vector<128x64xbf16>
    %c0_1 = arith.constant 0 : index
    %c0_2 = arith.constant 0 : index
    %3 = vector.load %arg2[%c0_1, %c0_2] : memref<64x128xbf16, #tpu.memory_space<vmem>>, vector<64x128xbf16>
    %cst = arith.constant dense<0.000000e+00> : vector<128x128xf32>
    %4 = tpu.matmul %2, %3, %cst {dimension_numbers = #tpu.dot_dimension_numbers<[1], [0], [0], [1], [0, 0, 1, 1], [], []>} : vector<128x64xbf16>, vector<64x128xbf16>, vector<128x128xf32> -> vector<128x128xf32>
    %5 = tpu.iota {dimensions = array<i32: 0>} : vector<128x1xi32>
    %6 = vector.broadcast %1 : i32 to vector<128x1xi32>
    %7 = arith.addi %6, %5 : vector<128x1xi32>
    %8 = tpu.iota {dimensions = array<i32: 1>} : vector<1x128xi32>
    %9 = vector.broadcast %7 : vector<128x1xi32> to vector<128x128xi32>
    %10 = vector.broadcast %8 : vector<1x128xi32> to vector<128x128xi32>
    %11 = arith.cmpi ne, %9, %10 : vector<128x128xi32>
    %cst_3 = arith.constant dense<0xFF800000> : vector<128xf32>
    %12 = vector.multi_reduction <maximumf>, %4, %cst_3 [1] : vector<128x128xf32> to vector<128xf32>
    %13 = vector.shape_cast %12 : vector<128xf32> to vector<128x1xf32>
    %14 = vector.broadcast %13 : vector<128x1xf32> to vector<128x128xf32>
    %15 = arith.subf %4, %14 : vector<128x128xf32>
    %16 = math.exp %15 : vector<128x128xf32>
    %17 = tpu.reciprocal %16 {approx = true} : vector<128x128xf32> -> vector<128x128xf32>
    %cst_4 = arith.constant 0.000000e+00 : f32
    %18 = vector.broadcast %cst_4 : f32 to vector<128x128xf32>
    %19 = arith.select %11, %17, %18 : vector<128x128xi1>, vector<128x128xf32>
    %cst_5 = arith.constant dense<0.000000e+00> : vector<128xf32>
    %20 = vector.multi_reduction <add>, %19, %cst_5 [1] : vector<128x128xf32> to vector<128xf32>
    %21 = vector.shape_cast %20 : vector<128xf32> to vector<128x1xf32>
    %22 = tpu.reciprocal %21 {approx = true} : vector<128x1xf32> -> vector<128x1xf32>
    %23 = vector.broadcast %22 : vector<128x1xf32> to vector<128x128xf32>
    %24 = arith.mulf %19, %23 : vector<128x128xf32>
    %25 = arith.truncf %24 : vector<128x128xf32> to vector<128x128xbf16>
    %c0_6 = arith.constant 0 : index
    %c0_7 = arith.constant 0 : index
    %26 = vector.load %arg5[%c0_6, %c0_7] : memref<128x128xbf16, #tpu.memory_space<vmem>>, vector<128x128xbf16>
    %cst_8 = arith.constant dense<0.000000e+00> : vector<128x128xf32>
    %27 = tpu.matmul %25, %26, %cst_8 {dimension_numbers = #tpu.dot_dimension_numbers<[1], [0], [0], [1], [0, 0, 1, 1], [], []>} : vector<128x128xbf16>, vector<128x128xbf16>, vector<128x128xf32> -> vector<128x128xf32>
    %28 = arith.index_cast %1 : i32 to index
    %c0_9 = arith.constant 0 : index
    %29 = vector.load %arg5[%28, %c0_9] : memref<128x128xbf16, #tpu.memory_space<vmem>>, vector<128x128xbf16>
    %30 = arith.extf %29 : vector<128x128xbf16> to vector<128x128xf32>
    %31 = arith.subf %30, %27 : vector<128x128xf32>
    %cst_10 = arith.constant 0.699999988 : f32
    %32 = vector.broadcast %cst_10 : f32 to vector<128x128xf32>
    %33 = arith.mulf %32, %31 : vector<128x128xf32>
    %c0_11 = arith.constant 0 : index
    %c0_12 = arith.constant 0 : index
    %34 = vector.load %arg6[%c0_11, %c0_12] : memref<128x128xf32, #tpu.memory_space<vmem>>, vector<128x128xf32>
    %cst_13 = arith.constant 3.000000e-01 : f32
    %35 = vector.broadcast %cst_13 : f32 to vector<128x128xf32>
    %36 = arith.mulf %35, %34 : vector<128x128xf32>
    %37 = arith.addf %33, %36 : vector<128x128xf32>
    %38 = tpu.iota {dimensions = array<i32: 1>} : vector<1x128xi32>
    %c10_i32 = arith.constant 10 : i32
    %39 = vector.broadcast %c10_i32 : i32 to vector<1x128xi32>
    %40 = arith.cmpi slt, %38, %39 : vector<1x128xi32>
    %cst_14 = arith.constant 0xFF800000 : f32
    %41 = vector.shape_cast %40 : vector<1x128xi1> to vector<1x128xi1>
    %42 = vector.broadcast %41 : vector<1x128xi1> to vector<128x128xi1>
    %43 = vector.broadcast %cst_14 : f32 to vector<128x128xf32>
    %44 = arith.select %42, %37, %43 : vector<128x128xi1>, vector<128x128xf32>
    %cst_15 = arith.constant dense<0xFF800000> : vector<128xf32>
    %45 = vector.multi_reduction <maximumf>, %44, %cst_15 [1] : vector<128x128xf32> to vector<128xf32>
    %46 = vector.shape_cast %45 : vector<128xf32> to vector<128x1xf32>
    %47 = vector.broadcast %46 : vector<128x1xf32> to vector<128x128xf32>
    %48 = arith.subf %44, %47 : vector<128x128xf32>
    %49 = math.exp %48 : vector<128x128xf32>
    %cst_16 = arith.constant dense<0.000000e+00> : vector<128xf32>
    %50 = vector.multi_reduction <add>, %49, %cst_16 [1] : vector<128x128xf32> to vector<128xf32>
    %51 = vector.shape_cast %50 : vector<128xf32> to vector<128x1xf32>
    %52 = tpu.reciprocal %51 {approx = true} : vector<128x1xf32> -> vector<128x1xf32>
    %53 = vector.broadcast %52 : vector<128x1xf32> to vector<128x128xf32>
    %54 = arith.mulf %49, %53 : vector<128x128xf32>
    %cst_17 = arith.constant 0.000000e+00 : f32
    %55 = vector.broadcast %cst_17 : f32 to vector<128x128xf32>
    %56 = arith.select %11, %16, %55 : vector<128x128xi1>, vector<128x128xf32>
    %cst_18 = arith.constant dense<0.000000e+00> : vector<128xf32>
    %57 = vector.multi_reduction <add>, %56, %cst_18 [1] : vector<128x128xf32> to vector<128xf32>
    %58 = vector.shape_cast %57 : vector<128xf32> to vector<128x1xf32>
    %59 = math.log %58 : vector<128x1xf32>
    %60 = vector.broadcast %59 : vector<128x1xf32> to vector<128x128xf32>
    %61 = arith.subf %15, %60 : vector<128x128xf32>
    %c0_19 = arith.constant 0 : index
    %c0_20 = arith.constant 0 : index
    %62 = vector.load %arg3[%c0_19, %c0_20] : memref<128x1xi32, #tpu.memory_space<vmem>>, vector<128x1xi32>
    %c0_21 = arith.constant 0 : index
    %c0_22 = arith.constant 0 : index
    %63 = vector.load %arg4[%c0_21, %c0_22] : memref<1x128xi32, #tpu.memory_space<vmem>>, vector<1x128xi32>
    %64 = vector.broadcast %62 : vector<128x1xi32> to vector<128x128xi32>
    %65 = vector.broadcast %63 : vector<1x128xi32> to vector<128x128xi32>
    %66 = arith.cmpi eq, %64, %65 : vector<128x128xi32>
    %67 = arith.andi %66, %11 : vector<128x128xi1>
    %cst_23 = arith.constant 0.000000e+00 : f32
    %68 = vector.broadcast %cst_23 : f32 to vector<128x128xf32>
    %69 = arith.select %67, %61, %68 : vector<128x128xi1>, vector<128x128xf32>
    %cst_24 = arith.constant dense<0.000000e+00> : vector<128xf32>
    %70 = vector.multi_reduction <add>, %69, %cst_24 [1] : vector<128x128xf32> to vector<128xf32>
    %71 = vector.shape_cast %70 : vector<128xf32> to vector<128x1xf32>
    %cst_25 = arith.constant 1.000000e+00 : f32
    %cst_26 = arith.constant 0.000000e+00 : f32
    %72 = vector.broadcast %cst_25 : f32 to vector<128x128xf32>
    %73 = vector.broadcast %cst_26 : f32 to vector<128x128xf32>
    %74 = arith.select %67, %72, %73 : vector<128x128xi1>, vector<128x128xf32>
    %cst_27 = arith.constant dense<0.000000e+00> : vector<128xf32>
    %75 = vector.multi_reduction <add>, %74, %cst_27 [1] : vector<128x128xf32> to vector<128xf32>
    %76 = vector.shape_cast %75 : vector<128xf32> to vector<128x1xf32>
    %cst_28 = arith.constant -1.000000e+00 : f32
    %77 = vector.broadcast %cst_28 : f32 to vector<128x1xf32>
    %78 = arith.mulf %77, %71 : vector<128x1xf32>
    %cst_29 = arith.constant 9.99999974E-6 : f32
    %79 = vector.broadcast %cst_29 : f32 to vector<128x1xf32>
    %80 = arith.addf %76, %79 : vector<128x1xf32>
    %81 = tpu.reciprocal %80 {approx = true} : vector<128x1xf32> -> vector<128x1xf32>
    %82 = arith.mulf %78, %81 : vector<128x1xf32>
    %c10_i32_30 = arith.constant 10 : i32
    %83 = vector.broadcast %c10_i32_30 : i32 to vector<1x128xi32>
    %84 = arith.cmpi eq, %38, %83 : vector<1x128xi32>
    %85 = vector.shape_cast %84 : vector<1x128xi1> to vector<1x128xi1>
    %86 = vector.broadcast %85 : vector<1x128xi1> to vector<128x128xi1>
    %87 = vector.shape_cast %82 : vector<128x1xf32> to vector<128x1xf32>
    %88 = vector.broadcast %87 : vector<128x1xf32> to vector<128x128xf32>
    %89 = arith.select %86, %88, %54 : vector<128x128xi1>, vector<128x128xf32>
    %c0_31 = arith.constant 0 : index
    %c0_32 = arith.constant 0 : index
    %90 = vector.load %arg7[%c0_31, %c0_32] : memref<128x128xf32, #tpu.memory_space<vmem>>, vector<128x128xf32>
    tpu.vector_store %arg7[%c0_31, %c0_32], %89 {strides = array<i32>} : memref<128x128xf32, #tpu.memory_space<vmem>>, vector<128x128xf32>,
    return
  }
  func.func @transform_0(%arg0: i32) -> (i32, i32) {
    %c0_i32 = arith.constant 0 : i32
    %c0_i32_0 = arith.constant 0 : i32
    return %arg0, %c0_i32 : i32, i32
  }
  func.func @transform_1(%arg0: i32) -> (i32, i32) {
    %c0_i32 = arith.constant 0 : i32
    %c0_i32_0 = arith.constant 0 : i32
    %c0_i32_1 = arith.constant 0 : i32
    return %c0_i32, %c0_i32_0 : i32, i32
  }
  func.func @transform_2(%arg0: i32) -> (i32, i32) {
    %c0_i32 = arith.constant 0 : i32
    %c0_i32_0 = arith.constant 0 : i32
    return %arg0, %c0_i32 : i32, i32
  }
  func.func @transform_3(%arg0: i32) -> (i32, i32) {
    %c0_i32 = arith.constant 0 : i32
    %c0_i32_0 = arith.constant 0 : i32
    %c0_i32_1 = arith.constant 0 : i32
    return %c0_i32, %c0_i32_0 : i32, i32
  }
  func.func @transform_4(%arg0: i32) -> (i32, i32) {
    %c0_i32 = arith.constant 0 : i32
    %c0_i32_0 = arith.constant 0 : i32
    %c0_i32_1 = arith.constant 0 : i32
    return %c0_i32, %c0_i32_0 : i32, i32
  }
  func.func @transform_5(%arg0: i32) -> (i32, i32) {
    %c0_i32 = arith.constant 0 : i32
    %c0_i32_0 = arith.constant 0 : i32
    return %arg0, %c0_i32 : i32, i32
  }
  func.func @transform_6(%arg0: i32) -> (i32, i32) {
    %c0_i32 = arith.constant 0 : i32
    %c0_i32_0 = arith.constant 0 : i32
    return %arg0, %c0_i32 : i32, i32
  }
}

module attributes {stable_mosaic.version = 11 : i64} {
  func.func @_supcon_row_kernel(%arg0: i32, %arg1: memref<128x64xbf16, #tpu.memory_space<vmem>>, %arg2: memref<64x128xbf16, #tpu.memory_space<vmem>>, %arg3: memref<128x1xi32, #tpu.memory_space<vmem>>, %arg4: memref<1x128xi32, #tpu.memory_space<vmem>>, %arg5: memref<128x128xbf16, #tpu.memory_space<vmem>>, %arg6: memref<128x128xf32, #tpu.memory_space<vmem>>, %arg7: memref<128x128xf32, #tpu.memory_space<vmem>>) attributes {dimension_semantics = [#tpu.dimension_semantics<parallel>], iteration_bounds = array<i64: 1>, scalar_prefetch = 0 : i64, scratch_operands = 0 : i64, tpu.core_type = #tpu.core_type<tc>, window_params = [{transform_indices = @transform_0, window_bounds = array<i64: 128, 64>}, {pipeline_mode = #tpu.pipeline_mode<synchronous>, transform_indices = @transform_1, window_bounds = array<i64: 64, 128>}, {transform_indices = @transform_2, window_bounds = array<i64: 128, 1>}, {pipeline_mode = #tpu.pipeline_mode<synchronous>, transform_indices = @transform_3, window_bounds = array<i64: 1, 128>}, {pipeline_mode = #tpu.pipeline_mode<synchronous>, transform_indices = @transform_4, window_bounds = array<i64: 128, 128>}, {transform_indices = @transform_5, window_bounds = array<i64: 128, 128>}, {transform_indices = @transform_6, window_bounds = array<i64: 128, 128>}]} {
    %c128_i32 = arith.constant 128 : i32
    %0 = arith.muli %arg0, %c128_i32 : i32
    %1 = tpu.assume_multiple %0, 128 : i32
    %c0 = arith.constant 0 : index
    %c0_0 = arith.constant 0 : index
    %2 = vector.load %arg1[%c0, %c0_0] : memref<128x64xbf16, #tpu.memory_space<vmem>>, vector<128x64xbf16>
    %c0_1 = arith.constant 0 : index
    %c0_2 = arith.constant 0 : index
    %3 = vector.load %arg2[%c0_1, %c0_2] : memref<64x128xbf16, #tpu.memory_space<vmem>>, vector<64x128xbf16>
    %cst = arith.constant dense<0.000000e+00> : vector<128x128xf32>
    %4 = tpu.matmul %2, %3, %cst {dimension_numbers = #tpu.dot_dimension_numbers<[1], [0], [0], [1], [0, 0, 1, 1], [], []>} : vector<128x64xbf16>, vector<64x128xbf16>, vector<128x128xf32> -> vector<128x128xf32>
    %5 = tpu.iota {dimensions = array<i32: 0>} : vector<128x1xi32>
    %6 = vector.broadcast %1 : i32 to vector<128x1xi32>
    %7 = arith.addi %6, %5 : vector<128x1xi32>
    %8 = tpu.iota {dimensions = array<i32: 1>} : vector<1x128xi32>
    %9 = vector.broadcast %7 : vector<128x1xi32> to vector<128x128xi32>
    %10 = vector.broadcast %8 : vector<1x128xi32> to vector<128x128xi32>
    %11 = arith.cmpi ne, %9, %10 : vector<128x128xi32>
    %cst_3 = arith.constant dense<0xFF800000> : vector<128xf32>
    %12 = vector.multi_reduction <maximumf>, %4, %cst_3 [1] : vector<128x128xf32> to vector<128xf32>
    %13 = vector.shape_cast %12 : vector<128xf32> to vector<128x1xf32>
    %14 = vector.broadcast %13 : vector<128x1xf32> to vector<128x128xf32>
    %15 = arith.subf %4, %14 : vector<128x128xf32>
    %16 = math.exp %15 : vector<128x128xf32>
    %17 = tpu.reciprocal %16 {approx = true} : vector<128x128xf32> -> vector<128x128xf32>
    %cst_4 = arith.constant 0.000000e+00 : f32
    %18 = vector.broadcast %cst_4 : f32 to vector<128x128xf32>
    %19 = arith.select %11, %17, %18 : vector<128x128xi1>, vector<128x128xf32>
    %cst_5 = arith.constant dense<0.000000e+00> : vector<128xf32>
    %20 = vector.multi_reduction <add>, %19, %cst_5 [1] : vector<128x128xf32> to vector<128xf32>
    %21 = vector.shape_cast %20 : vector<128xf32> to vector<128x1xf32>
    %22 = tpu.reciprocal %21 {approx = true} : vector<128x1xf32> -> vector<128x1xf32>
    %23 = vector.broadcast %22 : vector<128x1xf32> to vector<128x128xf32>
    %24 = arith.mulf %19, %23 : vector<128x128xf32>
    %25 = arith.truncf %24 : vector<128x128xf32> to vector<128x128xbf16>
    %c0_6 = arith.constant 0 : index
    %c0_7 = arith.constant 0 : index
    %26 = vector.load %arg5[%c0_6, %c0_7] : memref<128x128xbf16, #tpu.memory_space<vmem>>, vector<128x128xbf16>
    %cst_8 = arith.constant dense<0.000000e+00> : vector<128x128xf32>
    %27 = tpu.matmul %25, %26, %cst_8 {dimension_numbers = #tpu.dot_dimension_numbers<[1], [0], [0], [1], [0, 0, 1, 1], [], []>} : vector<128x128xbf16>, vector<128x128xbf16>, vector<128x128xf32> -> vector<128x128xf32>
    %28 = arith.index_cast %1 : i32 to index
    %c0_9 = arith.constant 0 : index
    %29 = vector.load %arg5[%28, %c0_9] : memref<128x128xbf16, #tpu.memory_space<vmem>>, vector<128x128xbf16>
    %30 = arith.extf %29 : vector<128x128xbf16> to vector<128x128xf32>
    %31 = arith.subf %30, %27 : vector<128x128xf32>
    %cst_10 = arith.constant 0.699999988 : f32
    %32 = vector.broadcast %cst_10 : f32 to vector<128x128xf32>
    %33 = arith.mulf %32, %31 : vector<128x128xf32>
    %c0_11 = arith.constant 0 : index
    %c0_12 = arith.constant 0 : index
    %34 = vector.load %arg6[%c0_11, %c0_12] : memref<128x128xf32, #tpu.memory_space<vmem>>, vector<128x128xf32>
    %cst_13 = arith.constant 3.000000e-01 : f32
    %35 = vector.broadcast %cst_13 : f32 to vector<128x128xf32>
    %36 = arith.mulf %35, %34 : vector<128x128xf32>
    %37 = arith.addf %33, %36 : vector<128x128xf32>
    %38 = tpu.iota {dimensions = array<i32: 1>} : vector<1x128xi32>
    %c10_i32 = arith.constant 10 : i32
    %39 = vector.broadcast %c10_i32 : i32 to vector<1x128xi32>
    %40 = arith.cmpi slt, %38, %39 : vector<1x128xi32>
    %cst_14 = arith.constant 0xFF800000 : f32
    %41 = vector.shape_cast %40 : vector<1x128xi1> to vector<1x128xi1>
    %42 = vector.broadcast %41 : vector<1x128xi1> to vector<128x128xi1>
    %43 = vector.broadcast %cst_14 : f32 to vector<128x128xf32>
    %44 = arith.select %42, %37, %43 : vector<128x128xi1>, vector<128x128xf32>
    %cst_15 = arith.constant dense<0xFF800000> : vector<128xf32>
    %45 = vector.multi_reduction <maximumf>, %44, %cst_15 [1] : vector<128x128xf32> to vector<128xf32>
    %46 = vector.shape_cast %45 : vector<128xf32> to vector<128x1xf32>
    %47 = vector.broadcast %46 : vector<128x1xf32> to vector<128x128xf32>
    %48 = arith.subf %44, %47 : vector<128x128xf32>
    %49 = math.exp %48 : vector<128x128xf32>
    %cst_16 = arith.constant dense<0.000000e+00> : vector<128xf32>
    %50 = vector.multi_reduction <add>, %49, %cst_16 [1] : vector<128x128xf32> to vector<128xf32>
    %51 = vector.shape_cast %50 : vector<128xf32> to vector<128x1xf32>
    %52 = tpu.reciprocal %51 {approx = true} : vector<128x1xf32> -> vector<128x1xf32>
    %53 = vector.broadcast %52 : vector<128x1xf32> to vector<128x128xf32>
    %54 = arith.mulf %49, %53 : vector<128x128xf32>
    %cst_17 = arith.constant 0.000000e+00 : f32
    %55 = vector.broadcast %cst_17 : f32 to vector<128x128xf32>
    %56 = arith.select %11, %16, %55 : vector<128x128xi1>, vector<128x128xf32>
    %cst_18 = arith.constant dense<0.000000e+00> : vector<128xf32>
    %57 = vector.multi_reduction <add>, %56, %cst_18 [1] : vector<128x128xf32> to vector<128xf32>
    %58 = vector.shape_cast %57 : vector<128xf32> to vector<128x1xf32>
    %59 = math.log %58 : vector<128x1xf32>
    %60 = vector.broadcast %59 : vector<128x1xf32> to vector<128x128xf32>
    %61 = arith.subf %15, %60 : vector<128x128xf32>
    %c0_19 = arith.constant 0 : index
    %c0_20 = arith.constant 0 : index
    %62 = vector.load %arg3[%c0_19, %c0_20] : memref<128x1xi32, #tpu.memory_space<vmem>>, vector<128x1xi32>
    %c0_21 = arith.constant 0 : index
    %c0_22 = arith.constant 0 : index
    %63 = vector.load %arg4[%c0_21, %c0_22] : memref<1x128xi32, #tpu.memory_space<vmem>>, vector<1x128xi32>
    %64 = vector.broadcast %62 : vector<128x1xi32> to vector<128x128xi32>
    %65 = vector.broadcast %63 : vector<1x128xi32> to vector<128x128xi32>
    %66 = arith.cmpi eq, %64, %65 : vector<128x128xi32>
    %67 = arith.andi %66, %11 : vector<128x128xi1>
    %cst_23 = arith.constant 0.000000e+00 : f32
    %68 = vector.broadcast %cst_23 : f32 to vector<128x128xf32>
    %69 = arith.select %67, %61, %68 : vector<128x128xi1>, vector<128x128xf32>
    %cst_24 = arith.constant dense<0.000000e+00> : vector<128xf32>
    %70 = vector.multi_reduction <add>, %69, %cst_24 [1] : vector<128x128xf32> to vector<128xf32>
    %71 = vector.shape_cast %70 : vector<128xf32> to vector<128x1xf32>
    %cst_25 = arith.constant 1.000000e+00 : f32
    %cst_26 = arith.constant 0.000000e+00 : f32
    %72 = vector.broadcast %cst_25 : f32 to vector<128x128xf32>
    %73 = vector.broadcast %cst_26 : f32 to vector<128x128xf32>
    %74 = arith.select %67, %72, %73 : vector<128x128xi1>, vector<128x128xf32>
    %cst_27 = arith.constant dense<0.000000e+00> : vector<128xf32>
    %75 = vector.multi_reduction <add>, %74, %cst_27 [1] : vector<128x128xf32> to vector<128xf32>
    %76 = vector.shape_cast %75 : vector<128xf32> to vector<128x1xf32>
    %cst_28 = arith.constant -1.000000e+00 : f32
    %77 = vector.broadcast %cst_28 : f32 to vector<128x1xf32>
    %78 = arith.mulf %77, %71 : vector<128x1xf32>
    %cst_29 = arith.constant 9.99999974E-6 : f32
    %79 = vector.broadcast %cst_29 : f32 to vector<128x1xf32>
    %80 = arith.addf %76, %79 : vector<128x1xf32>
    %81 = tpu.reciprocal %80 {approx = true} : vector<128x1xf32> -> vector<128x1xf32>
    %82 = arith.mulf %78, %81 : vector<128x1xf32>
    %c10_i32_30 = arith.constant 10 : i32
    %83 = vector.broadcast %c10_i32_30 : i32 to vector<1x128xi32>
    %84 = arith.cmpi eq, %38, %83 : vector<1x128xi32>
    %85 = vector.shape_cast %84 : vector<1x128xi1> to vector<1x128xi1>
    %86 = vector.broadcast %85 : vector<1x128xi1> to vector<128x128xi1>
    %87 = vector.shape_cast %82 : vector<128x1xf32> to vector<128x1xf32>
    %88 = vector.broadcast %87 : vector<128x1xf32> to vector<128x128xf32>
    %89 = arith.select %86, %88, %54 : vector<128x128xi1>, vector<128x128xf32>
    %c0_31 = arith.constant 0 : index
    %c0_32 = arith.constant 0 : index
    %90 = vector.load %arg7[%c0_31, %c0_32] : memref<128x128xf32, #tpu.memory_space<vmem>>, vector<128x128xf32>
    tpu.vector_store %arg7[%c0_31, %c0_32], %89 {strides = array<i32>} : memref<128x128xf32, #tpu.memory_space<vmem>>, vector<128x128xf32>,
    return
  }
  func.func @transform_0(%arg0: i32) -> (i32, i32) {
    %c0_i32 = arith.constant 0 : i32
    %c0_i32_0 = arith.constant 0 : i32
    return %arg0, %c0_i32 : i32, i32
  }
  func.func @transform_1(%arg0: i32) -> (i32, i32) {
    %c0_i32 = arith.constant 0 : i32
    %c0_i32_0 = arith.constant 0 : i32
    %c0_i32_1 = arith.constant 0 : i32
    return %c0_i32, %c0_i32_0 : i32, i32
  }
  func.func @transform_2(%arg0: i32) -> (i32, i32) {
    %c0_i32 = arith.constant 0 : i32
    %c0_i32_0 = arith.constant 0 : i32
    return %arg0, %c0_i32 : i32, i32
  }
  func.func @transform_3(%arg0: i32) -> (i32, i32) {
    %c0_i32 = arith.constant 0 : i32
    %c0_i32_0 = arith.constant 0 : i32
    %c0_i32_1 = arith.constant 0 : i32
    return %c0_i32, %c0_i32_0 : i32, i32
  }
  func.func @transform_4(%arg0: i32) -> (i32, i32) {
    %c0_i32 = arith.constant 0 : i32
    %c0_i32_0 = arith.constant 0 : i32
    %c0_i32_1 = arith.constant 0 : i32
    return %c0_i32, %c0_i32_0 : i32, i32
  }
  func.func @transform_5(%arg0: i32) -> (i32, i32) {
    %c0_i32 = arith.constant 0 : i32
    %c0_i32_0 = arith.constant 0 : i32
    return %arg0, %c0_i32 : i32, i32
  }
  func.func @transform_6(%arg0: i32) -> (i32, i32) {
    %c0_i32 = arith.constant 0 : i32
    %c0_i32_0 = arith.constant 0 : i32
    return %arg0, %c0_i32 : i32, i32
  }
}

</mosaic_0001>

<llo_original>
// kernel: tpu_custom_call.1
$region0: #{tpu_custom_call.1}
  #allocation0 [shape = 'u32[]', space=smem, size = 0x4, offset = 0x4, fixed_abs, tag = 'smem constant byte address 0x4 - core index']
  #allocation1 [shape = 'u32[72,128]{1,0:T(1,128)}', space=vmem, size = 0x9000, scoped, tag = 'internal scratch']
  %s0 = inlined_call_operand.vmem [shape: bf16[128,64], index: 0, kind: input, shape index: {}]
  %s1 = inlined_call_operand.vmem [shape: bf16[64,128], index: 1, kind: input, shape index: {}]
  %s2 = inlined_call_operand.vmem [shape: s32[128,1], index: 2, kind: input, shape index: {}]
  %s3 = inlined_call_operand.vmem [shape: s32[1,128], index: 3, kind: input, shape index: {}]
  %s4 = inlined_call_operand.vmem [shape: bf16[128,128], index: 4, kind: input, shape index: {}]
  %s5 = inlined_call_operand.vmem [shape: f32[128,128], index: 5, kind: input, shape index: {}]
  %s6 = inlined_call_operand.hbm [shape: f32[128,128], index: 6, kind: output, shape index: {}]
  %s7 = sld [smem:[#allocation0]]
  $region34: #{tpu_custom_call.1} parent=0
    _
  %s9 = ssub.s32 1, %s7
  %s10 = scalar_select 0, %s9, %s7
  $region1: #{tpu_custom_call.1} parent=0
    #allocation2 [shape = 'u8[65536]{0}', space=vmem, size = 0x10000, scoped, tag = 'output window, operand 0, single buffered']
    #allocation3 [shape = 's32[1]{0}', space=sflag, size = 0x4, scoped, tag = 'scoped memory for tpu_custom_call.1']
    %11 = vsyncpa [#allocation3], 0
    // Predicated region
    $region2: #{tpu_custom_call.1} parent=1 // pred_check
      _
    $region3: #{tpu_custom_call.1} parent=1 // pred_check_branch
      %13 = sbr.rel (0) target = $region5
    $region4: #{tpu_custom_call.1} parent=1 // pred_region
      _
    $region5: #{tpu_custom_call.1} parent=1 // pred_fallthru
      _
    // Predicated region
    $region6: #{tpu_custom_call.1} parent=1 // pred_check
      _
    $region7: #{tpu_custom_call.1} parent=1 // pred_check_branch
      %15 = sbr.rel (0) target = $region9
    $region8: #{tpu_custom_call.1} parent=1 // pred_region
      _
    $region9: #{tpu_custom_call.1} parent=1 // pred_fallthru
      _
    // Predicated region
    $region10: #{tpu_custom_call.1} parent=1 // pred_check
      _
    $region11: #{tpu_custom_call.1} parent=1 // pred_check_branch
      %17 = sbr.rel (0) target = $region13
    $region12: #{tpu_custom_call.1} parent=1 // pred_region
      _
    $region13: #{tpu_custom_call.1} parent=1 // pred_fallthru
      _
    // Predicated region
    $region14: #{tpu_custom_call.1} parent=1 // pred_check
      _
    $region15: #{tpu_custom_call.1} parent=1 // pred_check_branch
      %19 = sbr.rel (0) target = $region17
    $region16: #{tpu_custom_call.1} parent=1 // pred_region
      _
    $region17: #{tpu_custom_call.1} parent=1 // pred_fallthru
      _
    // Predicated region
    $region18: #{tpu_custom_call.1} parent=1 // pred_check
      _
    $region19: #{tpu_custom_call.1} parent=1 // pred_check_branch
      %21 = sbr.rel (0) target = $region21
    $region20: #{tpu_custom_call.1} parent=1 // pred_region
      _
    $region21: #{tpu_custom_call.1} parent=1 // pred_fallthru
      _
    // Predicated region
    $region22: #{tpu_custom_call.1} parent=1 // pred_check
      _
    $region23: #{tpu_custom_call.1} parent=1 // pred_check_branch
      %23 = sbr.rel (0) target = $region25
    $region24: #{tpu_custom_call.1} parent=1 // pred_region
      _
    $region25: #{tpu_custom_call.1} parent=1 // pred_fallthru
      _
    %s25 = smul.u32 0, 128
    %v26 = vld [vmem:[%s0] sm:$0xf]
    %v27 = vld [vmem:[%s0 + $0x4] sm:$0xf]
    %v28 = vld [vmem:[%s0 + $0x8] sm:$0xf]
    %v29 = vld [vmem:[%s0 + $0xc] sm:$0xf]
    %v30 = vld [vmem:[%s0 + $0x10] sm:$0xf]
    %v31 = vld [vmem:[%s0 + $0x14] sm:$0xf]
    %v32 = vld [vmem:[%s0 + $0x18] sm:$0xf]
    %v33 = vld [vmem:[%s0 + $0x1c] sm:$0xf]
    %v34 = vld [vmem:[%s0 + $0x20] sm:$0xf]
    %v35 = vld [vmem:[%s0 + $0x24] sm:$0xf]
    %v36 = vld [vmem:[%s0 + $0x28] sm:$0xf]
    %v37 = vld [vmem:[%s0 + $0x2c] sm:$0xf]
    %v38 = vld [vmem:[%s0 + $0x30] sm:$0xf]
    %v39 = vld [vmem:[%s0 + $0x34] sm:$0xf]
    %v40 = vld [vmem:[%s0 + $0x38] sm:$0xf]
    %v41 = vld [vmem:[%s0 + $0x3c] sm:$0xf]
    %v42 = vld [vmem:[%s1] sm:$0xf]
    %v43 = vld [vmem:[%s1 + $0x4] sm:$0xf]
    %v44 = vld [vmem:[%s1 + $0x8] sm:$0xf]
    %v45 = vld [vmem:[%s1 + $0xc] sm:$0xf]
    %v46 = vld [vmem:[%s1 + $0x10] sm:$0xf]
    %v47 = vld [vmem:[%s1 + $0x14] sm:$0xf]
    %v48 = vld [vmem:[%s1 + $0x18] sm:$0xf]
    %v49 = vld [vmem:[%s1 + $0x1c] sm:$0xf]
    %v66 = vunpack.c.l.b16 %v26
    %v67 = vunpack.c.l.b16 %v27
    %v68 = vunpack.c.l.b16 %v28
    %v69 = vunpack.c.l.b16 %v29
    %v70 = vunpack.c.l.b16 %v30
    %v71 = vunpack.c.l.b16 %v31
    %v72 = vunpack.c.l.b16 %v32
    %v73 = vunpack.c.l.b16 %v33
    %v74 = vunpack.c.l.b16 %v34
    %v75 = vunpack.c.l.b16 %v35
    %v76 = vunpack.c.l.b16 %v36
    %v77 = vunpack.c.l.b16 %v37
    %v78 = vunpack.c.l.b16 %v38
    %v79 = vunpack.c.l.b16 %v39
    %v80 = vunpack.c.l.b16 %v40
    %v81 = vunpack.c.l.b16 %v41
    %v82 = vpack.c.b16 %v67, %v66
    %v83 = vpack.c.b16 %v69, %v68
    %v84 = vpack.c.b16 %v71, %v70
    %v85 = vpack.c.b16 %v73, %v72
    %v86 = vpack.c.b16 %v75, %v74
    %v87 = vpack.c.b16 %v77, %v76
    %v88 = vpack.c.b16 %v79, %v78
    %v89 = vpack.c.b16 %v81, %v80
    %v98 = vunpack.c.l.b16 %v42
    %v99 = vunpack.c.l.b16 %v43
    %v100 = vunpack.c.l.b16 %v44
    %v101 = vunpack.c.l.b16 %v45
    %v102 = vunpack.c.l.b16 %v46
    %v103 = vunpack.c.l.b16 %v47
    %v104 = vunpack.c.l.b16 %v48
    %v105 = vunpack.c.l.b16 %v49
    %v106 = vpack.c.b16 %v99, %v98
    %v107 = vpack.c.b16 %v101, %v100
    %v108 = vpack.c.b16 %v103, %v102
    %v109 = vpack.c.b16 %v105, %v104
    %vm114 = vcmask 523264
    %v116 = vsel %vm114, %v82, 0
    %v119 = vsel %vm114, %v83, 0
    %v122 = vsel %vm114, %v84, 0
    %v125 = vsel %vm114, %v85, 0
    %v128 = vsel %vm114, %v86, 0
    %v131 = vsel %vm114, %v87, 0
    %v134 = vsel %vm114, %v88, 0
    %v137 = vsel %vm114, %v89, 0
    %139 = vmatpush.bf16.msra.mxu0 0
    %140 = vmatpush.bf16.msra.mxu0 0
    %141 = vmatpush.bf16.msra.mxu0 0
    %142 = vmatpush.bf16.msra.mxu0 0
    %143 = vmatpush.bf16.msra.mxu0 %v109
    %144 = vmatpush.bf16.msra.mxu0 %v108
    %145 = vmatpush.bf16.msra.mxu0 %v107
    %146 = vmatpush.bf16.msra.mxu0 %v106
    %147 = vmatmul.bf16.gmra.mxu0 %v116
    %v148 = vpop.f32.mrf.mxu0
    %v149 = vadd.f32 0.0, %v148
    %v150 = vpop.f32.mrf.mxu0
    %v151 = vadd.f32 0.0, %v150
    %152 = vmatmul.bf16.gmra.mxu0 %v119
    %v153 = vpop.f32.mrf.mxu0
    %v154 = vadd.f32 0.0, %v153
    %v155 = vpop.f32.mrf.mxu0
    %v156 = vadd.f32 0.0, %v155
    %157 = vmatmul.bf16.gmra.mxu0 %v122
    %v158 = vpop.f32.mrf.mxu0
    %v159 = vadd.f32 0.0, %v158
    %v160 = vpop.f32.mrf.mxu0
    %v161 = vadd.f32 0.0, %v160
    %162 = vmatmul.bf16.gmra.mxu0 %v125
    %v163 = vpop.f32.mrf.mxu0
    %v164 = vadd.f32 0.0, %v163
    %v165 = vpop.f32.mrf.mxu0
    %v166 = vadd.f32 0.0, %v165
    %167 = vmatmul.bf16.gmra.mxu0 %v128
    %v168 = vpop.f32.mrf.mxu0
    %v169 = vadd.f32 0.0, %v168
    %v170 = vpop.f32.mrf.mxu0
    %v171 = vadd.f32 0.0, %v170
    %172 = vmatmul.bf16.gmra.mxu0 %v131
    %v173 = vpop.f32.mrf.mxu0
    %v174 = vadd.f32 0.0, %v173
    %v175 = vpop.f32.mrf.mxu0
    %v176 = vadd.f32 0.0, %v175
    %177 = vmatmul.bf16.gmra.mxu0 %v134
    %v178 = vpop.f32.mrf.mxu0
    %v179 = vadd.f32 0.0, %v178
    %v180 = vpop.f32.mrf.mxu0
    %v181 = vadd.f32 0.0, %v180
    %182 = vmatmul.bf16.gmra.mxu0 %v137
    %v183 = vpop.f32.mrf.mxu0
    %v184 = vadd.f32 0.0, %v183
    %v185 = vpop.f32.mrf.mxu0
    %v186 = vadd.f32 0.0, %v185
    %187 = vdwg.mxu0
    %v188 = vlaneseq
    %v189 = vshrl.u32 %v188, 7
    %v190 = vadd.s32 %v189, 8
    %v191 = vadd.s32 %v189, 16
    %v192 = vadd.s32 %v189, 24
    %v193 = vadd.s32 %v189, 32
    %v194 = vadd.s32 %v189, 40
    %v195 = vadd.s32 %v189, 48
    %v196 = vadd.s32 %v189, 56
    %v197 = vadd.s32 %v189, 64
    %v198 = vadd.s32 %v189, 72
    %v199 = vadd.s32 %v189, 80
    %v200 = vadd.s32 %v189, 88
    %v201 = vadd.s32 %v189, 96
    %v202 = vadd.s32 %v189, 104
    %v203 = vadd.s32 %v189, 112
    %v204 = vadd.s32 %v189, 120
    %v205 = vstv %s25
    %v206 = vadd.s32 %v205, %v189
    %v207 = vadd.s32 %v205, %v190
    %v208 = vadd.s32 %v205, %v191
    %v209 = vadd.s32 %v205, %v192
    %v210 = vadd.s32 %v205, %v193
    %v211 = vadd.s32 %v205, %v194
    %v212 = vadd.s32 %v205, %v195
    %v213 = vadd.s32 %v205, %v196
    %v214 = vadd.s32 %v205, %v197
    %v215 = vadd.s32 %v205, %v198
    %v216 = vadd.s32 %v205, %v199
    %v217 = vadd.s32 %v205, %v200
    %v218 = vadd.s32 %v205, %v201
    %v219 = vadd.s32 %v205, %v202
    %v220 = vadd.s32 %v205, %v203
    %v221 = vadd.s32 %v205, %v204
    %v222 = vlaneseq
    %v223 = vand.u32 %v222, 127
    %vm224 = vcmp.ne.s32.totalorder %v206, %v223
    %vm225 = vcmp.ne.s32.totalorder %v207, %v223
    %vm226 = vcmp.ne.s32.totalorder %v208, %v223
    %vm227 = vcmp.ne.s32.totalorder %v209, %v223
    %vm228 = vcmp.ne.s32.totalorder %v210, %v223
    %vm229 = vcmp.ne.s32.totalorder %v211, %v223
    %vm230 = vcmp.ne.s32.totalorder %v212, %v223
    %vm231 = vcmp.ne.s32.totalorder %v213, %v223
    %vm232 = vcmp.ne.s32.totalorder %v214, %v223
    %vm233 = vcmp.ne.s32.totalorder %v215, %v223
    %vm234 = vcmp.ne.s32.totalorder %v216, %v223
    %vm235 = vcmp.ne.s32.totalorder %v217, %v223
    %vm236 = vcmp.ne.s32.totalorder %v218, %v223
    %vm237 = vcmp.ne.s32.totalorder %v219, %v223
    %vm238 = vcmp.ne.s32.totalorder %v220, %v223
    %vm239 = vcmp.ne.s32.totalorder %v221, %v223
    %240 = vmax.xlane.f32.xlu0 %v149
    %v241 = vpop.xlane.xlu0 %240
    %242 = vmax.xlane.f32.xlu0 %v151
    %v243 = vpop.xlane.xlu0 %242
    %244 = vmax.xlane.f32.xlu0 %v154
    %v245 = vpop.xlane.xlu0 %244
    %246 = vmax.xlane.f32.xlu0 %v156
    %v247 = vpop.xlane.xlu0 %246
    %248 = vmax.xlane.f32.xlu0 %v159
    %v249 = vpop.xlane.xlu0 %248
    %250 = vmax.xlane.f32.xlu0 %v161
    %v251 = vpop.xlane.xlu0 %250
    %252 = vmax.xlane.f32.xlu0 %v164
    %v253 = vpop.xlane.xlu0 %252
    %254 = vmax.xlane.f32.xlu0 %v166
    %v255 = vpop.xlane.xlu0 %254
    %256 = vmax.xlane.f32.xlu0 %v169
    %v257 = vpop.xlane.xlu0 %256
    %258 = vmax.xlane.f32.xlu0 %v171
    %v259 = vpop.xlane.xlu0 %258
    %260 = vmax.xlane.f32.xlu0 %v174
    %v261 = vpop.xlane.xlu0 %260
    %262 = vmax.xlane.f32.xlu0 %v176
    %v263 = vpop.xlane.xlu0 %262
    %264 = vmax.xlane.f32.xlu0 %v179
    %v265 = vpop.xlane.xlu0 %264
    %266 = vmax.xlane.f32.xlu0 %v181
    %v267 = vpop.xlane.xlu0 %266
    %268 = vmax.xlane.f32.xlu0 %v184
    %v269 = vpop.xlane.xlu0 %268
    %270 = vmax.xlane.f32.xlu0 %v186
    %v271 = vpop.xlane.xlu0 %270
    %v272 = vsub.f32 %v149, %v241
    %v273 = vsub.f32 %v151, %v243
    %v274 = vsub.f32 %v154, %v245
    %v275 = vsub.f32 %v156, %v247
    %v276 = vsub.f32 %v159, %v249
    %v277 = vsub.f32 %v161, %v251
    %v278 = vsub.f32 %v164, %v253
    %v279 = vsub.f32 %v166, %v255
    %v280 = vsub.f32 %v169, %v257
    %v281 = vsub.f32 %v171, %v259
    %v282 = vsub.f32 %v174, %v261
    %v283 = vsub.f32 %v176, %v263
    %v284 = vsub.f32 %v179, %v265
    %v285 = vsub.f32 %v181, %v267
    %v286 = vsub.f32 %v184, %v269
    %v287 = vsub.f32 %v186, %v271
    %v288 = vmul.f32 %v272, 1.442695
    %v289 = vpow.pop %v288
    %v290 = vmul.f32 %v273, 1.442695
    %v291 = vpow.pop %v290
    %v292 = vmul.f32 %v274, 1.442695
    %v293 = vpow.pop %v292
    %v294 = vmul.f32 %v275, 1.442695
    %v295 = vpow.pop %v294
    %v296 = vmul.f32 %v276, 1.442695
    %v297 = vpow.pop %v296
    %v298 = vmul.f32 %v277, 1.442695
    %v299 = vpow.pop %v298
    %v300 = vmul.f32 %v278, 1.442695
    %v301 = vpow.pop %v300
    %v302 = vmul.f32 %v279, 1.442695
    %v303 = vpow.pop %v302
    %v304 = vmul.f32 %v280, 1.442695
    %v305 = vpow.pop %v304
    %v306 = vmul.f32 %v281, 1.442695
    %v307 = vpow.pop %v306
    %v308 = vmul.f32 %v282, 1.442695
    %v309 = vpow.pop %v308
    %v310 = vmul.f32 %v283, 1.442695
    %v311 = vpow.pop %v310
    %v312 = vmul.f32 %v284, 1.442695
    %v313 = vpow.pop %v312
    %v314 = vmul.f32 %v285, 1.442695
    %v315 = vpow.pop %v314
    %v316 = vmul.f32 %v286, 1.442695
    %v317 = vpow.pop %v316
    %v318 = vmul.f32 %v287, 1.442695
    %v319 = vpow.pop %v318
    %v320 = vrcp.pop %v289
    %v321 = vrcp.pop %v291
    %v322 = vrcp.pop %v293
    %v323 = vrcp.pop %v295
    %v324 = vrcp.pop %v297
    %v325 = vrcp.pop %v299
    %v326 = vrcp.pop %v301
    %v327 = vrcp.pop %v303
    %v328 = vrcp.pop %v305
    %v329 = vrcp.pop %v307
    %v330 = vrcp.pop %v309
    %v331 = vrcp.pop %v311
    %v332 = vrcp.pop %v313
    %v333 = vrcp.pop %v315
    %v334 = vrcp.pop %v317
    %v335 = vrcp.pop %v319
    %v336 = vsel %vm224, %v320, 0.0
    %v337 = vsel %vm225, %v321, 0.0
    %v338 = vsel %vm226, %v322, 0.0
    %v339 = vsel %vm227, %v323, 0.0
    %v340 = vsel %vm228, %v324, 0.0
    %v341 = vsel %vm229, %v325, 0.0
    %v342 = vsel %vm230, %v326, 0.0
    %v343 = vsel %vm231, %v327, 0.0
    %v344 = vsel %vm232, %v328, 0.0
    %v345 = vsel %vm233, %v329, 0.0
    %v346 = vsel %vm234, %v330, 0.0
    %v347 = vsel %vm235, %v331, 0.0
    %v348 = vsel %vm236, %v332, 0.0
    %v349 = vsel %vm237, %v333, 0.0
    %v350 = vsel %vm238, %v334, 0.0
    %v351 = vsel %vm239, %v335, 0.0
    %352 = vadd.xlane.f32.xlu0 %v336
    %v353 = vpop.xlane.xlu0 %352
    %354 = vadd.xlane.f32.xlu0 %v337
    %v355 = vpop.xlane.xlu0 %354
    %356 = vadd.xlane.f32.xlu0 %v338
    %v357 = vpop.xlane.xlu0 %356
    %358 = vadd.xlane.f32.xlu0 %v339
    %v359 = vpop.xlane.xlu0 %358
    %360 = vadd.xlane.f32.xlu0 %v340
    %v361 = vpop.xlane.xlu0 %360
    %362 = vadd.xlane.f32.xlu0 %v341
    %v363 = vpop.xlane.xlu0 %362
    %364 = vadd.xlane.f32.xlu0 %v342
    %v365 = vpop.xlane.xlu0 %364
    %366 = vadd.xlane.f32.xlu0 %v343
    %v367 = vpop.xlane.xlu0 %366
    %368 = vadd.xlane.f32.xlu0 %v344
    %v369 = vpop.xlane.xlu0 %368
    %370 = vadd.xlane.f32.xlu0 %v345
    %v371 = vpop.xlane.xlu0 %370
    %372 = vadd.xlane.f32.xlu0 %v346
    %v373 = vpop.xlane.xlu0 %372
    %374 = vadd.xlane.f32.xlu0 %v347
    %v375 = vpop.xlane.xlu0 %374
    %376 = vadd.xlane.f32.xlu0 %v348
    %v377 = vpop.xlane.xlu0 %376
    %378 = vadd.xlane.f32.xlu0 %v349
    %v379 = vpop.xlane.xlu0 %378
    %380 = vadd.xlane.f32.xlu0 %v350
    %v381 = vpop.xlane.xlu0 %380
    %382 = vadd.xlane.f32.xlu0 %v351
    %v383 = vpop.xlane.xlu0 %382
    %v384 = vrcp.pop %v353
    %v385 = vrcp.pop %v355
    %v386 = vrcp.pop %v357
    %v387 = vrcp.pop %v359
    %v388 = vrcp.pop %v361
    %v389 = vrcp.pop %v363
    %v390 = vrcp.pop %v365
    %v391 = vrcp.pop %v367
    %v392 = vrcp.pop %v369
    %v393 = vrcp.pop %v371
    %v394 = vrcp.pop %v373
    %v395 = vrcp.pop %v375
    %v396 = vrcp.pop %v377
    %v397 = vrcp.pop %v379
    %v398 = vrcp.pop %v381
    %v399 = vrcp.pop %v383
    %v400 = vmul.f32 %v336, %v384
    %v401 = vmul.f32 %v337, %v385
    %v402 = vmul.f32 %v338, %v386
    %v403 = vmul.f32 %v339, %v387
    %v404 = vmul.f32 %v340, %v388
    %v405 = vmul.f32 %v341, %v389
    %v406 = vmul.f32 %v342, %v390
    %v407 = vmul.f32 %v343, %v391
    %v408 = vmul.f32 %v344, %v392
    %v409 = vmul.f32 %v345, %v393
    %v410 = vmul.f32 %v346, %v394
    %v411 = vmul.f32 %v347, %v395
    %v412 = vmul.f32 %v348, %v396
    %v413 = vmul.f32 %v349, %v397
    %v414 = vmul.f32 %v350, %v398
    %v415 = vmul.f32 %v351, %v399
    %v416 = vpack.c.bf16 %v401, %v400
    %v417 = vpack.c.bf16 %v403, %v402
    %v418 = vpack.c.bf16 %v405, %v404
    %v419 = vpack.c.bf16 %v407, %v406
    %v420 = vpack.c.bf16 %v409, %v408
    %v421 = vpack.c.bf16 %v411, %v410
    %v422 = vpack.c.bf16 %v413, %v412
    %v423 = vpack.c.bf16 %v415, %v414
    %v424 = vld [vmem:[%s4] sm:$0xf]
    %v425 = vld [vmem:[%s4 + $0x4] sm:$0xf]
    %v426 = vld [vmem:[%s4 + $0x8] sm:$0xf]
    %v427 = vld [vmem:[%s4 + $0xc] sm:$0xf]
    %v428 = vld [vmem:[%s4 + $0x10] sm:$0xf]
    %v429 = vld [vmem:[%s4 + $0x14] sm:$0xf]
    %v430 = vld [vmem:[%s4 + $0x18] sm:$0xf]
    %v431 = vld [vmem:[%s4 + $0x1c] sm:$0xf]
    %v432 = vld [vmem:[%s4 + $0x20] sm:$0xf]
    %v433 = vld [vmem:[%s4 + $0x24] sm:$0xf]
    %v434 = vld [vmem:[%s4 + $0x28] sm:$0xf]
    %v435 = vld [vmem:[%s4 + $0x2c] sm:$0xf]
    %v436 = vld [vmem:[%s4 + $0x30] sm:$0xf]
    %v437 = vld [vmem:[%s4 + $0x34] sm:$0xf]
    %v438 = vld [vmem:[%s4 + $0x38] sm:$0xf]
    %v439 = vld [vmem:[%s4 + $0x3c] sm:$0xf]
    %v456 = vunpack.c.l.b16 %v424
    %v457 = vunpack.c.l.b16 %v425
    %v458 = vunpack.c.l.b16 %v426
    %v459 = vunpack.c.l.b16 %v427
    %v460 = vunpack.c.l.b16 %v428
    %v461 = vunpack.c.l.b16 %v429
    %v462 = vunpack.c.l.b16 %v430
    %v463 = vunpack.c.l.b16 %v431
    %v464 = vunpack.c.l.b16 %v432
    %v465 = vunpack.c.l.b16 %v433
    %v466 = vunpack.c.l.b16 %v434
    %v467 = vunpack.c.l.b16 %v435
    %v468 = vunpack.c.l.b16 %v436
    %v469 = vunpack.c.l.b16 %v437
    %v470 = vunpack.c.l.b16 %v438
    %v471 = vunpack.c.l.b16 %v439
    %v472 = vpack.c.b16 %v457, %v456
    %v473 = vpack.c.b16 %v459, %v458
    %v474 = vpack.c.b16 %v461, %v460
    %v475 = vpack.c.b16 %v463, %v462
    %v476 = vpack.c.b16 %v465, %v464
    %v477 = vpack.c.b16 %v467, %v466
    %v478 = vpack.c.b16 %v469, %v468
    %v479 = vpack.c.b16 %v471, %v470
    %488 = vmatpush.bf16.msra.mxu0 %v479
    %489 = vmatpush.bf16.msra.mxu0 %v478
    %490 = vmatpush.bf16.msra.mxu0 %v477
    %491 = vmatpush.bf16.msra.mxu0 %v476
    %492 = vmatpush.bf16.msra.mxu0 %v475
    %493 = vmatpush.bf16.msra.mxu0 %v474
    %494 = vmatpush.bf16.msra.mxu0 %v473
    %495 = vmatpush.bf16.msra.mxu0 %v472
    %496 = vmatmul.bf16.gmra.mxu0 %v416
    %v497 = vpop.f32.mrf.mxu0
    %v498 = vadd.f32 0.0, %v497
    %v499 = vpop.f32.mrf.mxu0
    %v500 = vadd.f32 0.0, %v499
    %501 = vmatmul.bf16.gmra.mxu0 %v417
    %v502 = vpop.f32.mrf.mxu0
    %v503 = vadd.f32 0.0, %v502
    %v504 = vpop.f32.mrf.mxu0
    %v505 = vadd.f32 0.0, %v504
    %506 = vmatmul.bf16.gmra.mxu0 %v418
    %v507 = vpop.f32.mrf.mxu0
    %v508 = vadd.f32 0.0, %v507
    %v509 = vpop.f32.mrf.mxu0
    %v510 = vadd.f32 0.0, %v509
    %511 = vmatmul.bf16.gmra.mxu0 %v419
    %v512 = vpop.f32.mrf.mxu0
    %v513 = vadd.f32 0.0, %v512
    %v514 = vpop.f32.mrf.mxu0
    %v515 = vadd.f32 0.0, %v514
    %516 = vmatmul.bf16.gmra.mxu0 %v420
    %v517 = vpop.f32.mrf.mxu0
    %v518 = vadd.f32 0.0, %v517
    %v519 = vpop.f32.mrf.mxu0
    %v520 = vadd.f32 0.0, %v519
    %521 = vmatmul.bf16.gmra.mxu0 %v421
    %v522 = vpop.f32.mrf.mxu0
    %v523 = vadd.f32 0.0, %v522
    %v524 = vpop.f32.mrf.mxu0
    %v525 = vadd.f32 0.0, %v524
    %526 = vmatmul.bf16.gmra.mxu0 %v422
    %v527 = vpop.f32.mrf.mxu0
    %v528 = vadd.f32 0.0, %v527
    %v529 = vpop.f32.mrf.mxu0
    %v530 = vadd.f32 0.0, %v529
    %531 = vmatmul.bf16.gmra.mxu0 %v423
    %v532 = vpop.f32.mrf.mxu0
    %v533 = vadd.f32 0.0, %v532
    %v534 = vpop.f32.mrf.mxu0
    %v535 = vadd.f32 0.0, %v534
    %536 = vdwg.mxu0
    %s537 = sshra.s32 %s25, 3
    %s538 = sand.u32 %s25, 7
    %s539 = smul.addr %s537, 4
    %s540 = scalar_lea.vmem %s4, %s539
    %v541 = vld [vmem:[%s540] sm:$0xf]
    %v542 = vld [vmem:[%s540 + $0x4] sm:$0xf]
    %v543 = vld [vmem:[%s540 + $0x8] sm:$0xf]
    %v544 = vld [vmem:[%s540 + $0xc] sm:$0xf]
    %v545 = vld [vmem:[%s540 + $0x10] sm:$0xf]
    %v546 = vld [vmem:[%s540 + $0x14] sm:$0xf]
    %v547 = vld [vmem:[%s540 + $0x18] sm:$0xf]
    %v548 = vld [vmem:[%s540 + $0x1c] sm:$0xf]
    %v549 = vld [vmem:[%s540 + $0x20] sm:$0xf]
    %v550 = vld [vmem:[%s540 + $0x24] sm:$0xf]
    %v551 = vld [vmem:[%s540 + $0x28] sm:$0xf]
    %v552 = vld [vmem:[%s540 + $0x2c] sm:$0xf]
    %v553 = vld [vmem:[%s540 + $0x30] sm:$0xf]
    %v554 = vld [vmem:[%s540 + $0x34] sm:$0xf]
    %v555 = vld [vmem:[%s540 + $0x38] sm:$0xf]
    %v556 = vld [vmem:[%s540 + $0x3c] sm:$0xf]
    %v557 = vunpack.c.l.bf16 %v541
    %v558 = vunpack.c.l.bf16 %v542
    %v559 = vunpack.c.l.bf16 %v543
    %v560 = vunpack.c.l.bf16 %v544
    %v561 = vunpack.c.l.bf16 %v545
    %v562 = vunpack.c.l.bf16 %v546
    %v563 = vunpack.c.l.bf16 %v547
    %v564 = vunpack.c.l.bf16 %v548
    %v565 = vunpack.c.l.bf16 %v549
    %v566 = vunpack.c.l.bf16 %v550
    %v567 = vunpack.c.l.bf16 %v551
    %v568 = vunpack.c.l.bf16 %v552
    %v569 = vunpack.c.l.bf16 %v553
    %v570 = vunpack.c.l.bf16 %v554
    %v571 = vunpack.c.l.bf16 %v555
    %v572 = vunpack.c.l.bf16 %v556
    %v573 = vsub.f32 %v557, %v498
    %v574 = vsub.f32 %v558, %v500
    %v575 = vsub.f32 %v559, %v503
    %v576 = vsub.f32 %v560, %v505
    %v577 = vsub.f32 %v561, %v508
    %v578 = vsub.f32 %v562, %v510
    %v579 = vsub.f32 %v563, %v513
    %v580 = vsub.f32 %v564, %v515
    %v581 = vsub.f32 %v565, %v518
    %v582 = vsub.f32 %v566, %v520
    %v583 = vsub.f32 %v567, %v523
    %v584 = vsub.f32 %v568, %v525
    %v585 = vsub.f32 %v569, %v528
    %v586 = vsub.f32 %v570, %v530
    %v587 = vsub.f32 %v571, %v533
    %v588 = vsub.f32 %v572, %v535
    %v589 = vmul.f32 %v573, 0.7
    %v590 = vmul.f32 %v574, 0.7
    %v591 = vmul.f32 %v575, 0.7
    %v592 = vmul.f32 %v576, 0.7
    %v593 = vmul.f32 %v577, 0.7
    %v594 = vmul.f32 %v578, 0.7
    %v595 = vmul.f32 %v579, 0.7
    %v596 = vmul.f32 %v580, 0.7
    %v597 = vmul.f32 %v581, 0.7
    %v598 = vmul.f32 %v582, 0.7
    %v599 = vmul.f32 %v583, 0.7
    %v600 = vmul.f32 %v584, 0.7
    %v601 = vmul.f32 %v585, 0.7
    %v602 = vmul.f32 %v586, 0.7
    %v603 = vmul.f32 %v587, 0.7
    %v604 = vmul.f32 %v588, 0.7
    %v605 = vld [vmem:[%s5] sm:$0xff]
    %v606 = vld [vmem:[%s5 + $0x8] sm:$0xff]
    %v607 = vld [vmem:[%s5 + $0x10] sm:$0xff]
    %v608 = vld [vmem:[%s5 + $0x18] sm:$0xff]
    %v609 = vld [vmem:[%s5 + $0x20] sm:$0xff]
    %v610 = vld [vmem:[%s5 + $0x28] sm:$0xff]
    %v611 = vld [vmem:[%s5 + $0x30] sm:$0xff]
    %v612 = vld [vmem:[%s5 + $0x38] sm:$0xff]
    %v613 = vld [vmem:[%s5 + $0x40] sm:$0xff]
    %v614 = vld [vmem:[%s5 + $0x48] sm:$0xff]
    %v615 = vld [vmem:[%s5 + $0x50] sm:$0xff]
    %v616 = vld [vmem:[%s5 + $0x58] sm:$0xff]
    %v617 = vld [vmem:[%s5 + $0x60] sm:$0xff]
    %v618 = vld [vmem:[%s5 + $0x68] sm:$0xff]
    %v619 = vld [vmem:[%s5 + $0x70] sm:$0xff]
    %v620 = vld [vmem:[%s5 + $0x78] sm:$0xff]
    %v621 = vmul.f32 %v605, 0.3
    %v622 = vmul.f32 %v606, 0.3
    %v623 = vmul.f32 %v607, 0.3
    %v624 = vmul.f32 %v608, 0.3
    %v625 = vmul.f32 %v609, 0.3
    %v626 = vmul.f32 %v610, 0.3
    %v627 = vmul.f32 %v611, 0.3
    %v628 = vmul.f32 %v612, 0.3
    %v629 = vmul.f32 %v613, 0.3
    %v630 = vmul.f32 %v614, 0.3
    %v631 = vmul.f32 %v615, 0.3
    %v632 = vmul.f32 %v616, 0.3
    %v633 = vmul.f32 %v617, 0.3
    %v634 = vmul.f32 %v618, 0.3
    %v635 = vmul.f32 %v619, 0.3
    %v636 = vmul.f32 %v620, 0.3
    %v637 = vadd.f32 %v589, %v621
    %v638 = vadd.f32 %v590, %v622
    %v639 = vadd.f32 %v591, %v623
    %v640 = vadd.f32 %v592, %v624
    %v641 = vadd.f32 %v593, %v625
    %v642 = vadd.f32 %v594, %v626
    %v643 = vadd.f32 %v595, %v627
    %v644 = vadd.f32 %v596, %v628
    %v645 = vadd.f32 %v597, %v629
    %v646 = vadd.f32 %v598, %v630
    %v647 = vadd.f32 %v599, %v631
    %v648 = vadd.f32 %v600, %v632
    %v649 = vadd.f32 %v601, %v633
    %v650 = vadd.f32 %v602, %v634
    %v651 = vadd.f32 %v603, %v635
    %v652 = vadd.f32 %v604, %v636
    %vm653 = vcmp.lt.s32.totalorder %v223, 10
    %v654 = vsel %vm653, 1, 0
    %vm655 = vcmp.eq.s32.totalorder %v654, 1
    %v656 = vsel %vm655, %v637, -inf
    %v657 = vsel %vm655, %v638, -inf
    %v658 = vsel %vm655, %v639, -inf
    %v659 = vsel %vm655, %v640, -inf
    %v660 = vsel %vm655, %v641, -inf
    %v661 = vsel %vm655, %v642, -inf
    %v662 = vsel %vm655, %v643, -inf
    %v663 = vsel %vm655, %v644, -inf
    %v664 = vsel %vm655, %v645, -inf
    %v665 = vsel %vm655, %v646, -inf
    %v666 = vsel %vm655, %v647, -inf
    %v667 = vsel %vm655, %v648, -inf
    %v668 = vsel %vm655, %v649, -inf
    %v669 = vsel %vm655, %v650, -inf
    %v670 = vsel %vm655, %v651, -inf
    %v671 = vsel %vm655, %v652, -inf
    %672 = vmax.xlane.f32.xlu0 %v656
    %v673 = vpop.xlane.xlu0 %672
    %674 = vmax.xlane.f32.xlu0 %v657
    %v675 = vpop.xlane.xlu0 %674
    %676 = vmax.xlane.f32.xlu0 %v658
    %v677 = vpop.xlane.xlu0 %676
    %678 = vmax.xlane.f32.xlu0 %v659
    %v679 = vpop.xlane.xlu0 %678
    %680 = vmax.xlane.f32.xlu0 %v660
    %v681 = vpop.xlane.xlu0 %680
    %682 = vmax.xlane.f32.xlu0 %v661
    %v683 = vpop.xlane.xlu0 %682
    %684 = vmax.xlane.f32.xlu0 %v662
    %v685 = vpop.xlane.xlu0 %684
    %686 = vmax.xlane.f32.xlu0 %v663
    %v687 = vpop.xlane.xlu0 %686
    %688 = vmax.xlane.f32.xlu0 %v664
    %v689 = vpop.xlane.xlu0 %688
    %690 = vmax.xlane.f32.xlu0 %v665
    %v691 = vpop.xlane.xlu0 %690
    %692 = vmax.xlane.f32.xlu0 %v666
    %v693 = vpop.xlane.xlu0 %692
    %694 = vmax.xlane.f32.xlu0 %v667
    %v695 = vpop.xlane.xlu0 %694
    %696 = vmax.xlane.f32.xlu0 %v668
    %v697 = vpop.xlane.xlu0 %696
    %698 = vmax.xlane.f32.xlu0 %v669
    %v699 = vpop.xlane.xlu0 %698
    %700 = vmax.xlane.f32.xlu0 %v670
    %v701 = vpop.xlane.xlu0 %700
    %702 = vmax.xlane.f32.xlu0 %v671
    %v703 = vpop.xlane.xlu0 %702
    %v704 = vsub.f32 %v656, %v673
    %v705 = vsub.f32 %v657, %v675
    %v706 = vsub.f32 %v658, %v677
    %v707 = vsub.f32 %v659, %v679
    %v708 = vsub.f32 %v660, %v681
    %v709 = vsub.f32 %v661, %v683
    %v710 = vsub.f32 %v662, %v685
    %v711 = vsub.f32 %v663, %v687
    %v712 = vsub.f32 %v664, %v689
    %v713 = vsub.f32 %v665, %v691
    %v714 = vsub.f32 %v666, %v693
    %v715 = vsub.f32 %v667, %v695
    %v716 = vsub.f32 %v668, %v697
    %v717 = vsub.f32 %v669, %v699
    %v718 = vsub.f32 %v670, %v701
    %v719 = vsub.f32 %v671, %v703
    %v720 = vmul.f32 %v704, 1.442695
    %v721 = vpow.pop %v720
    %v722 = vmul.f32 %v705, 1.442695
    %v723 = vpow.pop %v722
    %v724 = vmul.f32 %v706, 1.442695
    %v725 = vpow.pop %v724
    %v726 = vmul.f32 %v707, 1.442695
    %v727 = vpow.pop %v726
    %v728 = vmul.f32 %v708, 1.442695
    %v729 = vpow.pop %v728
    %v730 = vmul.f32 %v709, 1.442695
    %v731 = vpow.pop %v730
    %v732 = vmul.f32 %v710, 1.442695
    %v733 = vpow.pop %v732
    %v734 = vmul.f32 %v711, 1.442695
    %v735 = vpow.pop %v734
    %v736 = vmul.f32 %v712, 1.442695
    %v737 = vpow.pop %v736
    %v738 = vmul.f32 %v713, 1.442695
    %v739 = vpow.pop %v738
    %v740 = vmul.f32 %v714, 1.442695
    %v741 = vpow.pop %v740
    %v742 = vmul.f32 %v715, 1.442695
    %v743 = vpow.pop %v742
    %v744 = vmul.f32 %v716, 1.442695
    %v745 = vpow.pop %v744
    %v746 = vmul.f32 %v717, 1.442695
    %v747 = vpow.pop %v746
    %v748 = vmul.f32 %v718, 1.442695
    %v749 = vpow.pop %v748
    %v750 = vmul.f32 %v719, 1.442695
    %v751 = vpow.pop %v750
    %752 = vadd.xlane.f32.xlu0 %v721
    %v753 = vpop.xlane.xlu0 %752
    %754 = vadd.xlane.f32.xlu0 %v723
    %v755 = vpop.xlane.xlu0 %754
    %756 = vadd.xlane.f32.xlu0 %v725
    %v757 = vpop.xlane.xlu0 %756
    %758 = vadd.xlane.f32.xlu0 %v727
    %v759 = vpop.xlane.xlu0 %758
    %760 = vadd.xlane.f32.xlu0 %v729
    %v761 = vpop.xlane.xlu0 %760
    %762 = vadd.xlane.f32.xlu0 %v731
    %v763 = vpop.xlane.xlu0 %762
    %764 = vadd.xlane.f32.xlu0 %v733
    %v765 = vpop.xlane.xlu0 %764
    %766 = vadd.xlane.f32.xlu0 %v735
    %v767 = vpop.xlane.xlu0 %766
    %768 = vadd.xlane.f32.xlu0 %v737
    %v769 = vpop.xlane.xlu0 %768
    %770 = vadd.xlane.f32.xlu0 %v739
    %v771 = vpop.xlane.xlu0 %770
    %772 = vadd.xlane.f32.xlu0 %v741
    %v773 = vpop.xlane.xlu0 %772
    %774 = vadd.xlane.f32.xlu0 %v743
    %v775 = vpop.xlane.xlu0 %774
    %776 = vadd.xlane.f32.xlu0 %v745
    %v777 = vpop.xlane.xlu0 %776
    %778 = vadd.xlane.f32.xlu0 %v747
    %v779 = vpop.xlane.xlu0 %778
    %780 = vadd.xlane.f32.xlu0 %v749
    %v781 = vpop.xlane.xlu0 %780
    %782 = vadd.xlane.f32.xlu0 %v751
    %v783 = vpop.xlane.xlu0 %782
    %v784 = vrcp.pop %v753
    %v785 = vrcp.pop %v755
    %v786 = vrcp.pop %v757
    %v787 = vrcp.pop %v759
    %v788 = vrcp.pop %v761
    %v789 = vrcp.pop %v763
    %v790 = vrcp.pop %v765
    %v791 = vrcp.pop %v767
    %v792 = vrcp.pop %v769
    %v793 = vrcp.pop %v771
    %v794 = vrcp.pop %v773
    %v795 = vrcp.pop %v775
    %v796 = vrcp.pop %v777
    %v797 = vrcp.pop %v779
    %v798 = vrcp.pop %v781
    %v799 = vrcp.pop %v783
    %v800 = vmul.f32 %v721, %v784
    %v801 = vmul.f32 %v723, %v785
    %v802 = vmul.f32 %v725, %v786
    %v803 = vmul.f32 %v727, %v787
    %v804 = vmul.f32 %v729, %v788
    %v805 = vmul.f32 %v731, %v789
    %v806 = vmul.f32 %v733, %v790
    %v807 = vmul.f32 %v735, %v791
    %v808 = vmul.f32 %v737, %v792
    %v809 = vmul.f32 %v739, %v793
    %v810 = vmul.f32 %v741, %v794
    %v811 = vmul.f32 %v743, %v795
    %v812 = vmul.f32 %v745, %v796
    %v813 = vmul.f32 %v747, %v797
    %v814 = vmul.f32 %v749, %v798
    %v815 = vmul.f32 %v751, %v799
    %v816 = vsel %vm224, %v289, 0.0
    %v817 = vsel %vm225, %v291, 0.0
    %v818 = vsel %vm226, %v293, 0.0
    %v819 = vsel %vm227, %v295, 0.0
    %v820 = vsel %vm228, %v297, 0.0
    %v821 = vsel %vm229, %v299, 0.0
    %v822 = vsel %vm230, %v301, 0.0
    %v823 = vsel %vm231, %v303, 0.0
    %v824 = vsel %vm232, %v305, 0.0
    %v825 = vsel %vm233, %v307, 0.0
    %v826 = vsel %vm234, %v309, 0.0
    %v827 = vsel %vm235, %v311, 0.0
    %v828 = vsel %vm236, %v313, 0.0
    %v829 = vsel %vm237, %v315, 0.0
    %v830 = vsel %vm238, %v317, 0.0
    %v831 = vsel %vm239, %v319, 0.0
    %832 = vadd.xlane.f32.xlu0 %v816
    %v833 = vpop.xlane.xlu0 %832
    %834 = vadd.xlane.f32.xlu0 %v817
    %v835 = vpop.xlane.xlu0 %834
    %836 = vadd.xlane.f32.xlu0 %v818
    %v837 = vpop.xlane.xlu0 %836
    %838 = vadd.xlane.f32.xlu0 %v819
    %v839 = vpop.xlane.xlu0 %838
    %840 = vadd.xlane.f32.xlu0 %v820
    %v841 = vpop.xlane.xlu0 %840
    %842 = vadd.xlane.f32.xlu0 %v821
    %v843 = vpop.xlane.xlu0 %842
    %844 = vadd.xlane.f32.xlu0 %v822
    %v845 = vpop.xlane.xlu0 %844
    %846 = vadd.xlane.f32.xlu0 %v823
    %v847 = vpop.xlane.xlu0 %846
    %848 = vadd.xlane.f32.xlu0 %v824
    %v849 = vpop.xlane.xlu0 %848
    %850 = vadd.xlane.f32.xlu0 %v825
    %v851 = vpop.xlane.xlu0 %850
    %852 = vadd.xlane.f32.xlu0 %v826
    %v853 = vpop.xlane.xlu0 %852
    %854 = vadd.xlane.f32.xlu0 %v827
    %v855 = vpop.xlane.xlu0 %854
    %856 = vadd.xlane.f32.xlu0 %v828
    %v857 = vpop.xlane.xlu0 %856
    %858 = vadd.xlane.f32.xlu0 %v829
    %v859 = vpop.xlane.xlu0 %858
    %860 = vadd.xlane.f32.xlu0 %v830
    %v861 = vpop.xlane.xlu0 %860
    %862 = vadd.xlane.f32.xlu0 %v831
    %v863 = vpop.xlane.xlu0 %862
    %v864 = vlog2.pop %v833
    %v865 = vmul.f32 %v864, 0.6931472
    %v866 = vlog2.pop %v835
    %v867 = vmul.f32 %v866, 0.6931472
    %v868 = vlog2.pop %v837
    %v869 = vmul.f32 %v868, 0.6931472
    %v870 = vlog2.pop %v839
    %v871 = vmul.f32 %v870, 0.6931472
    %v872 = vlog2.pop %v841
    %v873 = vmul.f32 %v872, 0.6931472
    %v874 = vlog2.pop %v843
    %v875 = vmul.f32 %v874, 0.6931472
    %v876 = vlog2.pop %v845
    %v877 = vmul.f32 %v876, 0.6931472
    %v878 = vlog2.pop %v847
    %v879 = vmul.f32 %v878, 0.6931472
    %v880 = vlog2.pop %v849
    %v881 = vmul.f32 %v880, 0.6931472
    %v882 = vlog2.pop %v851
    %v883 = vmul.f32 %v882, 0.6931472
    %v884 = vlog2.pop %v853
    %v885 = vmul.f32 %v884, 0.6931472
    %v886 = vlog2.pop %v855
    %v887 = vmul.f32 %v886, 0.6931472
    %v888 = vlog2.pop %v857
    %v889 = vmul.f32 %v888, 0.6931472
    %v890 = vlog2.pop %v859
    %v891 = vmul.f32 %v890, 0.6931472
    %v892 = vlog2.pop %v861
    %v893 = vmul.f32 %v892, 0.6931472
    %v894 = vlog2.pop %v863
    %v895 = vmul.f32 %v894, 0.6931472
    %v896 = vsub.f32 %v272, %v865
    %v897 = vsub.f32 %v273, %v867
    %v898 = vsub.f32 %v274, %v869
    %v899 = vsub.f32 %v275, %v871
    %v900 = vsub.f32 %v276, %v873
    %v901 = vsub.f32 %v277, %v875
    %v902 = vsub.f32 %v278, %v877
    %v903 = vsub.f32 %v279, %v879
    %v904 = vsub.f32 %v280, %v881
    %v905 = vsub.f32 %v281, %v883
    %v906 = vsub.f32 %v282, %v885
    %v907 = vsub.f32 %v283, %v887
    %v908 = vsub.f32 %v284, %v889
    %v909 = vsub.f32 %v285, %v891
    %v910 = vsub.f32 %v286, %v893
    %v911 = vsub.f32 %v287, %v895
    %v912 = vld [vmem:[%s2] sm:$0xff]
    %v913 = vld [vmem:[%s2 + $0x8] sm:$0xff]
    %v914 = vld [vmem:[%s2 + $0x10] sm:$0xff]
    %v915 = vld [vmem:[%s2 + $0x18] sm:$0xff]
    %v916 = vld [vmem:[%s2 + $0x20] sm:$0xff]
    %v917 = vld [vmem:[%s2 + $0x28] sm:$0xff]
    %v918 = vld [vmem:[%s2 + $0x30] sm:$0xff]
    %v919 = vld [vmem:[%s2 + $0x38] sm:$0xff]
    %v920 = vld [vmem:[%s2 + $0x40] sm:$0xff]
    %v921 = vld [vmem:[%s2 + $0x48] sm:$0xff]
    %v922 = vld [vmem:[%s2 + $0x50] sm:$0xff]
    %v923 = vld [vmem:[%s2 + $0x58] sm:$0xff]
    %v924 = vld [vmem:[%s2 + $0x60] sm:$0xff]
    %v925 = vld [vmem:[%s2 + $0x68] sm:$0xff]
    %v926 = vld [vmem:[%s2 + $0x70] sm:$0xff]
    %v927 = vld [vmem:[%s2 + $0x78] sm:$0xff]
    %v928 = vld [vmem:[%s3] sm:$0x1]
    %929 = vset.pattern.permute.xlu0 0
    %930 = vperm.xlu0 %929, %v912
    %v931 = vpop.permute.xlu0 %930
    %932 = vset.pattern.permute.xlu0 0
    %933 = vperm.xlu0 %932, %v913
    %v934 = vpop.permute.xlu0 %933
    %935 = vset.pattern.permute.xlu0 0
    %936 = vperm.xlu0 %935, %v914
    %v937 = vpop.permute.xlu0 %936
    %938 = vset.pattern.permute.xlu0 0
    %939 = vperm.xlu0 %938, %v915
    %v940 = vpop.permute.xlu0 %939
    %941 = vset.pattern.permute.xlu0 0
    %942 = vperm.xlu0 %941, %v916
    %v943 = vpop.permute.xlu0 %942
    %944 = vset.pattern.permute.xlu0 0
    %945 = vperm.xlu0 %944, %v917
    %v946 = vpop.permute.xlu0 %945
    %947 = vset.pattern.permute.xlu0 0
    %948 = vperm.xlu0 %947, %v918
    %v949 = vpop.permute.xlu0 %948
    %950 = vset.pattern.permute.xlu0 0
    %951 = vperm.xlu0 %950, %v919
    %v952 = vpop.permute.xlu0 %951
    %953 = vset.pattern.permute.xlu0 0
    %954 = vperm.xlu0 %953, %v920
    %v955 = vpop.permute.xlu0 %954
    %956 = vset.pattern.permute.xlu0 0
    %957 = vperm.xlu0 %956, %v921
    %v958 = vpop.permute.xlu0 %957
    %959 = vset.pattern.permute.xlu0 0
    %960 = vperm.xlu0 %959, %v922
    %v961 = vpop.permute.xlu0 %960
    %962 = vset.pattern.permute.xlu0 0
    %963 = vperm.xlu0 %962, %v923
    %v964 = vpop.permute.xlu0 %963
    %965 = vset.pattern.permute.xlu0 0
    %966 = vperm.xlu0 %965, %v924
    %v967 = vpop.permute.xlu0 %966
    %968 = vset.pattern.permute.xlu0 0
    %969 = vperm.xlu0 %968, %v925
    %v970 = vpop.permute.xlu0 %969
    %971 = vset.pattern.permute.xlu0 0
    %972 = vperm.xlu0 %971, %v926
    %v973 = vpop.permute.xlu0 %972
    %974 = vset.pattern.permute.xlu0 0
    %975 = vperm.xlu0 %974, %v927
    %v976 = vpop.permute.xlu0 %975
    %v977 = vperm.slane %v928, 0
    %vm978 = vcmp.eq.s32.totalorder %v931, %v977
    %vm979 = vcmp.eq.s32.totalorder %v934, %v977
    %vm980 = vcmp.eq.s32.totalorder %v937, %v977
    %vm981 = vcmp.eq.s32.totalorder %v940, %v977
    %vm982 = vcmp.eq.s32.totalorder %v943, %v977
    %vm983 = vcmp.eq.s32.totalorder %v946, %v977
    %vm984 = vcmp.eq.s32.totalorder %v949, %v977
    %vm985 = vcmp.eq.s32.totalorder %v952, %v977
    %vm986 = vcmp.eq.s32.totalorder %v955, %v977
    %vm987 = vcmp.eq.s32.totalorder %v958, %v977
    %vm988 = vcmp.eq.s32.totalorder %v961, %v977
    %vm989 = vcmp.eq.s32.totalorder %v964, %v977
    %vm990 = vcmp.eq.s32.totalorder %v967, %v977
    %vm991 = vcmp.eq.s32.totalorder %v970, %v977
    %vm992 = vcmp.eq.s32.totalorder %v973, %v977
    %vm993 = vcmp.eq.s32.totalorder %v976, %v977
    %vm994 = vmand %vm978, %vm224
    %vm995 = vmand %vm979, %vm225
    %vm996 = vmand %vm980, %vm226
    %vm997 = vmand %vm981, %vm227
    %vm998 = vmand %vm982, %vm228
    %vm999 = vmand %vm983, %vm229
    %vm1000 = vmand %vm984, %vm230
    %vm1001 = vmand %vm985, %vm231
    %vm1002 = vmand %vm986, %vm232
    %vm1003 = vmand %vm987, %vm233
    %vm1004 = vmand %vm988, %vm234
    %vm1005 = vmand %vm989, %vm235
    %vm1006 = vmand %vm990, %vm236
    %vm1007 = vmand %vm991, %vm237
    %vm1008 = vmand %vm992, %vm238
    %vm1009 = vmand %vm993, %vm239
    %v1010 = vsel %vm994, %v896, 0.0
    %v1011 = vsel %vm995, %v897, 0.0
    %v1012 = vsel %vm996, %v898, 0.0
    %v1013 = vsel %vm997, %v899, 0.0
    %v1014 = vsel %vm998, %v900, 0.0
    %v1015 = vsel %vm999, %v901, 0.0
    %v1016 = vsel %vm1000, %v902, 0.0
    %v1017 = vsel %vm1001, %v903, 0.0
    %v1018 = vsel %vm1002, %v904, 0.0
    %v1019 = vsel %vm1003, %v905, 0.0
    %v1020 = vsel %vm1004, %v906, 0.0
    %v1021 = vsel %vm1005, %v907, 0.0
    %v1022 = vsel %vm1006, %v908, 0.0
    %v1023 = vsel %vm1007, %v909, 0.0
    %v1024 = vsel %vm1008, %v910, 0.0
    %v1025 = vsel %vm1009, %v911, 0.0
    %1026 = vadd.xlane.f32.xlu0 %v1010
    %v1027 = vpop.xlane.xlu0 %1026
    %1028 = vadd.xlane.f32.xlu0 %v1011
    %v1029 = vpop.xlane.xlu0 %1028
    %1030 = vadd.xlane.f32.xlu0 %v1012
    %v1031 = vpop.xlane.xlu0 %1030
    %1032 = vadd.xlane.f32.xlu0 %v1013
    %v1033 = vpop.xlane.xlu0 %1032
    %1034 = vadd.xlane.f32.xlu0 %v1014
    %v1035 = vpop.xlane.xlu0 %1034
    %1036 = vadd.xlane.f32.xlu0 %v1015
    %v1037 = vpop.xlane.xlu0 %1036
    %1038 = vadd.xlane.f32.xlu0 %v1016
    %v1039 = vpop.xlane.xlu0 %1038
    %1040 = vadd.xlane.f32.xlu0 %v1017
    %v1041 = vpop.xlane.xlu0 %1040
    %1042 = vadd.xlane.f32.xlu0 %v1018
    %v1043 = vpop.xlane.xlu0 %1042
    %1044 = vadd.xlane.f32.xlu0 %v1019
    %v1045 = vpop.xlane.xlu0 %1044
    %1046 = vadd.xlane.f32.xlu0 %v1020
    %v1047 = vpop.xlane.xlu0 %1046
    %1048 = vadd.xlane.f32.xlu0 %v1021
    %v1049 = vpop.xlane.xlu0 %1048
    %1050 = vadd.xlane.f32.xlu0 %v1022
    %v1051 = vpop.xlane.xlu0 %1050
    %1052 = vadd.xlane.f32.xlu0 %v1023
    %v1053 = vpop.xlane.xlu0 %1052
    %1054 = vadd.xlane.f32.xlu0 %v1024
    %v1055 = vpop.xlane.xlu0 %1054
    %1056 = vadd.xlane.f32.xlu0 %v1025
    %v1057 = vpop.xlane.xlu0 %1056
    %v1058 = vsel %vm994, 1.0, 0.0
    %v1059 = vsel %vm995, 1.0, 0.0
    %v1060 = vsel %vm996, 1.0, 0.0
    %v1061 = vsel %vm997, 1.0, 0.0
    %v1062 = vsel %vm998, 1.0, 0.0
    %v1063 = vsel %vm999, 1.0, 0.0
    %v1064 = vsel %vm1000, 1.0, 0.0
    %v1065 = vsel %vm1001, 1.0, 0.0
    %v1066 = vsel %vm1002, 1.0, 0.0
    %v1067 = vsel %vm1003, 1.0, 0.0
    %v1068 = vsel %vm1004, 1.0, 0.0
    %v1069 = vsel %vm1005, 1.0, 0.0
    %v1070 = vsel %vm1006, 1.0, 0.0
    %v1071 = vsel %vm1007, 1.0, 0.0
    %v1072 = vsel %vm1008, 1.0, 0.0
    %v1073 = vsel %vm1009, 1.0, 0.0
    %1074 = vadd.xlane.f32.xlu0 %v1058
    %v1075 = vpop.xlane.xlu0 %1074
    %1076 = vadd.xlane.f32.xlu0 %v1059
    %v1077 = vpop.xlane.xlu0 %1076
    %1078 = vadd.xlane.f32.xlu0 %v1060
    %v1079 = vpop.xlane.xlu0 %1078
    %1080 = vadd.xlane.f32.xlu0 %v1061
    %v1081 = vpop.xlane.xlu0 %1080
    %1082 = vadd.xlane.f32.xlu0 %v1062
    %v1083 = vpop.xlane.xlu0 %1082
    %1084 = vadd.xlane.f32.xlu0 %v1063
    %v1085 = vpop.xlane.xlu0 %1084
    %1086 = vadd.xlane.f32.xlu0 %v1064
    %v1087 = vpop.xlane.xlu0 %1086
    %1088 = vadd.xlane.f32.xlu0 %v1065
    %v1089 = vpop.xlane.xlu0 %1088
    %1090 = vadd.xlane.f32.xlu0 %v1066
    %v1091 = vpop.xlane.xlu0 %1090
    %1092 = vadd.xlane.f32.xlu0 %v1067
    %v1093 = vpop.xlane.xlu0 %1092
    %1094 = vadd.xlane.f32.xlu0 %v1068
    %v1095 = vpop.xlane.xlu0 %1094
    %1096 = vadd.xlane.f32.xlu0 %v1069
    %v1097 = vpop.xlane.xlu0 %1096
    %1098 = vadd.xlane.f32.xlu0 %v1070
    %v1099 = vpop.xlane.xlu0 %1098
    %1100 = vadd.xlane.f32.xlu0 %v1071
    %v1101 = vpop.xlane.xlu0 %1100
    %1102 = vadd.xlane.f32.xlu0 %v1072
    %v1103 = vpop.xlane.xlu0 %1102
    %1104 = vadd.xlane.f32.xlu0 %v1073
    %v1105 = vpop.xlane.xlu0 %1104
    %v1106 = vmul.f32 %v1027, -1.0
    %v1107 = vmul.f32 %v1029, -1.0
    %v1108 = vmul.f32 %v1031, -1.0
    %v1109 = vmul.f32 %v1033, -1.0
    %v1110 = vmul.f32 %v1035, -1.0
    %v1111 = vmul.f32 %v1037, -1.0
    %v1112 = vmul.f32 %v1039, -1.0
    %v1113 = vmul.f32 %v1041, -1.0
    %v1114 = vmul.f32 %v1043, -1.0
    %v1115 = vmul.f32 %v1045, -1.0
    %v1116 = vmul.f32 %v1047, -1.0
    %v1117 = vmul.f32 %v1049, -1.0
    %v1118 = vmul.f32 %v1051, -1.0
    %v1119 = vmul.f32 %v1053, -1.0
    %v1120 = vmul.f32 %v1055, -1.0
    %v1121 = vmul.f32 %v1057, -1.0
    %v1122 = vadd.f32 %v1075, 1e-05
    %v1123 = vadd.f32 %v1077, 1e-05
    %v1124 = vadd.f32 %v1079, 1e-05
    %v1125 = vadd.f32 %v1081, 1e-05
    %v1126 = vadd.f32 %v1083, 1e-05
    %v1127 = vadd.f32 %v1085, 1e-05
    %v1128 = vadd.f32 %v1087, 1e-05
    %v1129 = vadd.f32 %v1089, 1e-05
    %v1130 = vadd.f32 %v1091, 1e-05
    %v1131 = vadd.f32 %v1093, 1e-05
    %v1132 = vadd.f32 %v1095, 1e-05
    %v1133 = vadd.f32 %v1097, 1e-05
    %v1134 = vadd.f32 %v1099, 1e-05
    %v1135 = vadd.f32 %v1101, 1e-05
    %v1136 = vadd.f32 %v1103, 1e-05
    %v1137 = vadd.f32 %v1105, 1e-05
    %v1138 = vrcp.pop %v1122
    %v1139 = vrcp.pop %v1123
    %v1140 = vrcp.pop %v1124
    %v1141 = vrcp.pop %v1125
    %v1142 = vrcp.pop %v1126
    %v1143 = vrcp.pop %v1127
    %v1144 = vrcp.pop %v1128
    %v1145 = vrcp.pop %v1129
    %v1146 = vrcp.pop %v1130
    %v1147 = vrcp.pop %v1131
    %v1148 = vrcp.pop %v1132
    %v1149 = vrcp.pop %v1133
    %v1150 = vrcp.pop %v1134
    %v1151 = vrcp.pop %v1135
    %v1152 = vrcp.pop %v1136
    %v1153 = vrcp.pop %v1137
    %v1154 = vmul.f32 %v1106, %v1138
    %v1155 = vmul.f32 %v1107, %v1139
    %v1156 = vmul.f32 %v1108, %v1140
    %v1157 = vmul.f32 %v1109, %v1141
    %v1158 = vmul.f32 %v1110, %v1142
    %v1159 = vmul.f32 %v1111, %v1143
    %v1160 = vmul.f32 %v1112, %v1144
    %v1161 = vmul.f32 %v1113, %v1145
    %v1162 = vmul.f32 %v1114, %v1146
    %v1163 = vmul.f32 %v1115, %v1147
    %v1164 = vmul.f32 %v1116, %v1148
    %v1165 = vmul.f32 %v1117, %v1149
    %v1166 = vmul.f32 %v1118, %v1150
    %v1167 = vmul.f32 %v1119, %v1151
    %v1168 = vmul.f32 %v1120, %v1152
    %v1169 = vmul.f32 %v1121, %v1153
    %vm1170 = vcmp.eq.s32.totalorder %v223, 10
    %v1171 = vsel %vm1170, 1, 0
    %vm1172 = vcmp.eq.s32.totalorder %v1171, 1
    %v1173 = vsel %vm1172, %v1154, %v800
    %v1174 = vsel %vm1172, %v1155, %v801
    %v1175 = vsel %vm1172, %v1156, %v802
    %v1176 = vsel %vm1172, %v1157, %v803
    %v1177 = vsel %vm1172, %v1158, %v804
    %v1178 = vsel %vm1172, %v1159, %v805
    %v1179 = vsel %vm1172, %v1160, %v806
    %v1180 = vsel %vm1172, %v1161, %v807
    %v1181 = vsel %vm1172, %v1162, %v808
    %v1182 = vsel %vm1172, %v1163, %v809
    %v1183 = vsel %vm1172, %v1164, %v810
    %v1184 = vsel %vm1172, %v1165, %v811
    %v1185 = vsel %vm1172, %v1166, %v812
    %v1186 = vsel %vm1172, %v1167, %v813
    %v1187 = vsel %vm1172, %v1168, %v814
    %v1188 = vsel %vm1172, %v1169, %v815
    %1189 = vst [vmem:[#allocation2] sm:$0xff] %v1173
    %1190 = vst [vmem:[#allocation2 + $0x8] sm:$0xff] %v1174
    %1191 = vst [vmem:[#allocation2 + $0x10] sm:$0xff] %v1175
    %1192 = vst [vmem:[#allocation2 + $0x18] sm:$0xff] %v1176
    %1193 = vst [vmem:[#allocation2 + $0x20] sm:$0xff] %v1177
    %1194 = vst [vmem:[#allocation2 + $0x28] sm:$0xff] %v1178
    %1195 = vst [vmem:[#allocation2 + $0x30] sm:$0xff] %v1179
    %1196 = vst [vmem:[#allocation2 + $0x38] sm:$0xff] %v1180
    %1197 = vst [vmem:[#allocation2 + $0x40] sm:$0xff] %v1181
    %1198 = vst [vmem:[#allocation2 + $0x48] sm:$0xff] %v1182
    %1199 = vst [vmem:[#allocation2 + $0x50] sm:$0xff] %v1183
    %1200 = vst [vmem:[#allocation2 + $0x58] sm:$0xff] %v1184
    %1201 = vst [vmem:[#allocation2 + $0x60] sm:$0xff] %v1185
    %1202 = vst [vmem:[#allocation2 + $0x68] sm:$0xff] %v1186
    %1203 = vst [vmem:[#allocation2 + $0x70] sm:$0xff] %v1187
    %1204 = vst [vmem:[#allocation2 + $0x78] sm:$0xff] %v1188
    // Predicated region
    $region26: #{tpu_custom_call.1} parent=1 // pred_check
      _
    $region27: #{tpu_custom_call.1} parent=1 // pred_check_branch
      %1206 = sbr.rel (0) target = $region29
    $region28: #{tpu_custom_call.1} parent=1 // pred_region
      %1208 = vsyncadd [#allocation3], 0
      %s1209 = sshll.u32 [#allocation2], 4
      %s1210 = int_to_ptr.vmem [resolvable:$true] %s1209
      %s1211 = sshll.u32 %s6, 4
      %s1212 = int_to_ptr.hbm [resolvable:$true] %s1211
      %1217 = dma.vmem_to_hbm [thread:$0]  %s1210, 2048, %s1212, [#allocation3], 128, 128, 8
    $region29: #{tpu_custom_call.1} parent=1 // pred_fallthru
      _
    // Predicated region
    $region30: #{tpu_custom_call.1} parent=1 // pred_check
      _
    $region31: #{tpu_custom_call.1} parent=1 // pred_check_branch
      %1219 = sbr.rel (0) target = $region33
    $region32: #{tpu_custom_call.1} parent=1 // pred_region
      %1221 = dma.done [#allocation3], 2048
    $region33: #{tpu_custom_call.1} parent=1 // pred_fallthru
      _
    %1222 = vsyncpa [#allocation3], 1

// kernel: tpu_custom_call.1
$region0: #{tpu_custom_call.1}
  #allocation0 [shape = 'u32[]', space=smem, size = 0x4, offset = 0x4, fixed_abs, tag = 'smem constant byte address 0x4 - core index']
  #allocation1 [shape = 'u32[72,128]{1,0:T(1,128)}', space=vmem, size = 0x9000, scoped, tag = 'internal scratch']
  %s0 = inlined_call_operand.vmem [shape: bf16[128,64], index: 0, kind: input, shape index: {}]
  %s1 = inlined_call_operand.vmem [shape: bf16[64,128], index: 1, kind: input, shape index: {}]
  %s2 = inlined_call_operand.vmem [shape: s32[128,1], index: 2, kind: input, shape index: {}]
  %s3 = inlined_call_operand.vmem [shape: s32[1,128], index: 3, kind: input, shape index: {}]
  %s4 = inlined_call_operand.vmem [shape: bf16[128,128], index: 4, kind: input, shape index: {}]
  %s5 = inlined_call_operand.vmem [shape: f32[128,128], index: 5, kind: input, shape index: {}]
  %s6 = inlined_call_operand.hbm [shape: f32[128,128], index: 6, kind: output, shape index: {}]
  %s7 = sld [smem:[#allocation0]]
  $region34: #{tpu_custom_call.1} parent=0
    _
  %s9 = ssub.s32 1, %s7
  %s10 = scalar_select 0, %s9, %s7
  $region1: #{tpu_custom_call.1} parent=0
    #allocation2 [shape = 'u8[65536]{0}', space=vmem, size = 0x10000, scoped, tag = 'output window, operand 0, single buffered']
    #allocation3 [shape = 's32[1]{0}', space=sflag, size = 0x4, scoped, tag = 'scoped memory for tpu_custom_call.1']
    %11 = vsyncpa [#allocation3], 0
    // Predicated region
    $region2: #{tpu_custom_call.1} parent=1 // pred_check
      _
    $region3: #{tpu_custom_call.1} parent=1 // pred_check_branch
      %13 = sbr.rel (0) target = $region5
    $region4: #{tpu_custom_call.1} parent=1 // pred_region
      _
    $region5: #{tpu_custom_call.1} parent=1 // pred_fallthru
      _
    // Predicated region
    $region6: #{tpu_custom_call.1} parent=1 // pred_check
      _
    $region7: #{tpu_custom_call.1} parent=1 // pred_check_branch
      %15 = sbr.rel (0) target = $region9
    $region8: #{tpu_custom_call.1} parent=1 // pred_region
      _
    $region9: #{tpu_custom_call.1} parent=1 // pred_fallthru
      _
    // Predicated region
    $region10: #{tpu_custom_call.1} parent=1 // pred_check
      _
    $region11: #{tpu_custom_call.1} parent=1 // pred_check_branch
      %17 = sbr.rel (0) target = $region13
    $region12: #{tpu_custom_call.1} parent=1 // pred_region
      _
    $region13: #{tpu_custom_call.1} parent=1 // pred_fallthru
      _
    // Predicated region
    $region14: #{tpu_custom_call.1} parent=1 // pred_check
      _
    $region15: #{tpu_custom_call.1} parent=1 // pred_check_branch
      %19 = sbr.rel (0) target = $region17
    $region16: #{tpu_custom_call.1} parent=1 // pred_region
      _
    $region17: #{tpu_custom_call.1} parent=1 // pred_fallthru
      _
    // Predicated region
    $region18: #{tpu_custom_call.1} parent=1 // pred_check
      _
    $region19: #{tpu_custom_call.1} parent=1 // pred_check_branch
      %21 = sbr.rel (0) target = $region21
    $region20: #{tpu_custom_call.1} parent=1 // pred_region
      _
    $region21: #{tpu_custom_call.1} parent=1 // pred_fallthru
      _
    // Predicated region
    $region22: #{tpu_custom_call.1} parent=1 // pred_check
      _
    $region23: #{tpu_custom_call.1} parent=1 // pred_check_branch
      %23 = sbr.rel (0) target = $region25
    $region24: #{tpu_custom_call.1} parent=1 // pred_region
      _
    $region25: #{tpu_custom_call.1} parent=1 // pred_fallthru
      _
    %s25 = smul.u32 0, 128
    %v26 = vld [vmem:[%s0] sm:$0xf]
    %v27 = vld [vmem:[%s0 + $0x4] sm:$0xf]
    %v28 = vld [vmem:[%s0 + $0x8] sm:$0xf]
    %v29 = vld [vmem:[%s0 + $0xc] sm:$0xf]
    %v30 = vld [vmem:[%s0 + $0x10] sm:$0xf]
    %v31 = vld [vmem:[%s0 + $0x14] sm:$0xf]
    %v32 = vld [vmem:[%s0 + $0x18] sm:$0xf]
    %v33 = vld [vmem:[%s0 + $0x1c] sm:$0xf]
    %v34 = vld [vmem:[%s0 + $0x20] sm:$0xf]
    %v35 = vld [vmem:[%s0 + $0x24] sm:$0xf]
    %v36 = vld [vmem:[%s0 + $0x28] sm:$0xf]
    %v37 = vld [vmem:[%s0 + $0x2c] sm:$0xf]
    %v38 = vld [vmem:[%s0 + $0x30] sm:$0xf]
    %v39 = vld [vmem:[%s0 + $0x34] sm:$0xf]
    %v40 = vld [vmem:[%s0 + $0x38] sm:$0xf]
    %v41 = vld [vmem:[%s0 + $0x3c] sm:$0xf]
    %v42 = vld [vmem:[%s1] sm:$0xf]
    %v43 = vld [vmem:[%s1 + $0x4] sm:$0xf]
    %v44 = vld [vmem:[%s1 + $0x8] sm:$0xf]
    %v45 = vld [vmem:[%s1 + $0xc] sm:$0xf]
    %v46 = vld [vmem:[%s1 + $0x10] sm:$0xf]
    %v47 = vld [vmem:[%s1 + $0x14] sm:$0xf]
    %v48 = vld [vmem:[%s1 + $0x18] sm:$0xf]
    %v49 = vld [vmem:[%s1 + $0x1c] sm:$0xf]
    %v66 = vunpack.c.l.b16 %v26
    %v67 = vunpack.c.l.b16 %v27
    %v68 = vunpack.c.l.b16 %v28
    %v69 = vunpack.c.l.b16 %v29
    %v70 = vunpack.c.l.b16 %v30
    %v71 = vunpack.c.l.b16 %v31
    %v72 = vunpack.c.l.b16 %v32
    %v73 = vunpack.c.l.b16 %v33
    %v74 = vunpack.c.l.b16 %v34
    %v75 = vunpack.c.l.b16 %v35
    %v76 = vunpack.c.l.b16 %v36
    %v77 = vunpack.c.l.b16 %v37
    %v78 = vunpack.c.l.b16 %v38
    %v79 = vunpack.c.l.b16 %v39
    %v80 = vunpack.c.l.b16 %v40
    %v81 = vunpack.c.l.b16 %v41
    %v82 = vpack.c.b16 %v67, %v66
    %v83 = vpack.c.b16 %v69, %v68
    %v84 = vpack.c.b16 %v71, %v70
    %v85 = vpack.c.b16 %v73, %v72
    %v86 = vpack.c.b16 %v75, %v74
    %v87 = vpack.c.b16 %v77, %v76
    %v88 = vpack.c.b16 %v79, %v78
    %v89 = vpack.c.b16 %v81, %v80
    %v98 = vunpack.c.l.b16 %v42
    %v99 = vunpack.c.l.b16 %v43
    %v100 = vunpack.c.l.b16 %v44
    %v101 = vunpack.c.l.b16 %v45
    %v102 = vunpack.c.l.b16 %v46
    %v103 = vunpack.c.l.b16 %v47
    %v104 = vunpack.c.l.b16 %v48
    %v105 = vunpack.c.l.b16 %v49
    %v106 = vpack.c.b16 %v99, %v98
    %v107 = vpack.c.b16 %v101, %v100
    %v108 = vpack.c.b16 %v103, %v102
    %v109 = vpack.c.b16 %v105, %v104
    %vm114 = vcmask 523264
    %v116 = vsel %vm114, %v82, 0
    %v119 = vsel %vm114, %v83, 0
    %v122 = vsel %vm114, %v84, 0
    %v125 = vsel %vm114, %v85, 0
    %v128 = vsel %vm114, %v86, 0
    %v131 = vsel %vm114, %v87, 0
    %v134 = vsel %vm114, %v88, 0
    %v137 = vsel %vm114, %v89, 0
    %139 = vmatpush.bf16.msra.mxu0 0
    %140 = vmatpush.bf16.msra.mxu0 0
    %141 = vmatpush.bf16.msra.mxu0 0
    %142 = vmatpush.bf16.msra.mxu0 0
    %143 = vmatpush.bf16.msra.mxu0 %v109
    %144 = vmatpush.bf16.msra.mxu0 %v108
    %145 = vmatpush.bf16.msra.mxu0 %v107
    %146 = vmatpush.bf16.msra.mxu0 %v106
    %147 = vmatmul.bf16.gmra.mxu0 %v116
    %v148 = vpop.f32.mrf.mxu0
    %v149 = vadd.f32 0.0, %v148
    %v150 = vpop.f32.mrf.mxu0
    %v151 = vadd.f32 0.0, %v150
    %152 = vmatmul.bf16.gmra.mxu0 %v119
    %v153 = vpop.f32.mrf.mxu0
    %v154 = vadd.f32 0.0, %v153
    %v155 = vpop.f32.mrf.mxu0
    %v156 = vadd.f32 0.0, %v155
    %157 = vmatmul.bf16.gmra.mxu0 %v122
    %v158 = vpop.f32.mrf.mxu0
    %v159 = vadd.f32 0.0, %v158
    %v160 = vpop.f32.mrf.mxu0
    %v161 = vadd.f32 0.0, %v160
    %162 = vmatmul.bf16.gmra.mxu0 %v125
    %v163 = vpop.f32.mrf.mxu0
    %v164 = vadd.f32 0.0, %v163
    %v165 = vpop.f32.mrf.mxu0
    %v166 = vadd.f32 0.0, %v165
    %167 = vmatmul.bf16.gmra.mxu0 %v128
    %v168 = vpop.f32.mrf.mxu0
    %v169 = vadd.f32 0.0, %v168
    %v170 = vpop.f32.mrf.mxu0
    %v171 = vadd.f32 0.0, %v170
    %172 = vmatmul.bf16.gmra.mxu0 %v131
    %v173 = vpop.f32.mrf.mxu0
    %v174 = vadd.f32 0.0, %v173
    %v175 = vpop.f32.mrf.mxu0
    %v176 = vadd.f32 0.0, %v175
    %177 = vmatmul.bf16.gmra.mxu0 %v134
    %v178 = vpop.f32.mrf.mxu0
    %v179 = vadd.f32 0.0, %v178
    %v180 = vpop.f32.mrf.mxu0
    %v181 = vadd.f32 0.0, %v180
    %182 = vmatmul.bf16.gmra.mxu0 %v137
    %v183 = vpop.f32.mrf.mxu0
    %v184 = vadd.f32 0.0, %v183
    %v185 = vpop.f32.mrf.mxu0
    %v186 = vadd.f32 0.0, %v185
    %187 = vdwg.mxu0
    %v188 = vlaneseq
    %v189 = vshrl.u32 %v188, 7
    %v190 = vadd.s32 %v189, 8
    %v191 = vadd.s32 %v189, 16
    %v192 = vadd.s32 %v189, 24
    %v193 = vadd.s32 %v189, 32
    %v194 = vadd.s32 %v189, 40
    %v195 = vadd.s32 %v189, 48
    %v196 = vadd.s32 %v189, 56
    %v197 = vadd.s32 %v189, 64
    %v198 = vadd.s32 %v189, 72
    %v199 = vadd.s32 %v189, 80
    %v200 = vadd.s32 %v189, 88
    %v201 = vadd.s32 %v189, 96
    %v202 = vadd.s32 %v189, 104
    %v203 = vadd.s32 %v189, 112
    %v204 = vadd.s32 %v189, 120
    %v205 = vstv %s25
    %v206 = vadd.s32 %v205, %v189
    %v207 = vadd.s32 %v205, %v190
    %v208 = vadd.s32 %v205, %v191
    %v209 = vadd.s32 %v205, %v192
    %v210 = vadd.s32 %v205, %v193
    %v211 = vadd.s32 %v205, %v194
    %v212 = vadd.s32 %v205, %v195
    %v213 = vadd.s32 %v205, %v196
    %v214 = vadd.s32 %v205, %v197
    %v215 = vadd.s32 %v205, %v198
    %v216 = vadd.s32 %v205, %v199
    %v217 = vadd.s32 %v205, %v200
    %v218 = vadd.s32 %v205, %v201
    %v219 = vadd.s32 %v205, %v202
    %v220 = vadd.s32 %v205, %v203
    %v221 = vadd.s32 %v205, %v204
    %v222 = vlaneseq
    %v223 = vand.u32 %v222, 127
    %vm224 = vcmp.ne.s32.totalorder %v206, %v223
    %vm225 = vcmp.ne.s32.totalorder %v207, %v223
    %vm226 = vcmp.ne.s32.totalorder %v208, %v223
    %vm227 = vcmp.ne.s32.totalorder %v209, %v223
    %vm228 = vcmp.ne.s32.totalorder %v210, %v223
    %vm229 = vcmp.ne.s32.totalorder %v211, %v223
    %vm230 = vcmp.ne.s32.totalorder %v212, %v223
    %vm231 = vcmp.ne.s32.totalorder %v213, %v223
    %vm232 = vcmp.ne.s32.totalorder %v214, %v223
    %vm233 = vcmp.ne.s32.totalorder %v215, %v223
    %vm234 = vcmp.ne.s32.totalorder %v216, %v223
    %vm235 = vcmp.ne.s32.totalorder %v217, %v223
    %vm236 = vcmp.ne.s32.totalorder %v218, %v223
    %vm237 = vcmp.ne.s32.totalorder %v219, %v223
    %vm238 = vcmp.ne.s32.totalorder %v220, %v223
    %vm239 = vcmp.ne.s32.totalorder %v221, %v223
    %240 = vmax.xlane.f32.xlu0 %v149
    %v241 = vpop.xlane.xlu0 %240
    %242 = vmax.xlane.f32.xlu0 %v151
    %v243 = vpop.xlane.xlu0 %242
    %244 = vmax.xlane.f32.xlu0 %v154
    %v245 = vpop.xlane.xlu0 %244
    %246 = vmax.xlane.f32.xlu0 %v156
    %v247 = vpop.xlane.xlu0 %246
    %248 = vmax.xlane.f32.xlu0 %v159
    %v249 = vpop.xlane.xlu0 %248
    %250 = vmax.xlane.f32.xlu0 %v161
    %v251 = vpop.xlane.xlu0 %250
    %252 = vmax.xlane.f32.xlu0 %v164
    %v253 = vpop.xlane.xlu0 %252
    %254 = vmax.xlane.f32.xlu0 %v166
    %v255 = vpop.xlane.xlu0 %254
    %256 = vmax.xlane.f32.xlu0 %v169
    %v257 = vpop.xlane.xlu0 %256
    %258 = vmax.xlane.f32.xlu0 %v171
    %v259 = vpop.xlane.xlu0 %258
    %260 = vmax.xlane.f32.xlu0 %v174
    %v261 = vpop.xlane.xlu0 %260
    %262 = vmax.xlane.f32.xlu0 %v176
    %v263 = vpop.xlane.xlu0 %262
    %264 = vmax.xlane.f32.xlu0 %v179
    %v265 = vpop.xlane.xlu0 %264
    %266 = vmax.xlane.f32.xlu0 %v181
    %v267 = vpop.xlane.xlu0 %266
    %268 = vmax.xlane.f32.xlu0 %v184
    %v269 = vpop.xlane.xlu0 %268
    %270 = vmax.xlane.f32.xlu0 %v186
    %v271 = vpop.xlane.xlu0 %270
    %v272 = vsub.f32 %v149, %v241
    %v273 = vsub.f32 %v151, %v243
    %v274 = vsub.f32 %v154, %v245
    %v275 = vsub.f32 %v156, %v247
    %v276 = vsub.f32 %v159, %v249
    %v277 = vsub.f32 %v161, %v251
    %v278 = vsub.f32 %v164, %v253
    %v279 = vsub.f32 %v166, %v255
    %v280 = vsub.f32 %v169, %v257
    %v281 = vsub.f32 %v171, %v259
    %v282 = vsub.f32 %v174, %v261
    %v283 = vsub.f32 %v176, %v263
    %v284 = vsub.f32 %v179, %v265
    %v285 = vsub.f32 %v181, %v267
    %v286 = vsub.f32 %v184, %v269
    %v287 = vsub.f32 %v186, %v271
    %v288 = vmul.f32 %v272, 1.442695
    %v289 = vpow.pop %v288
    %v290 = vmul.f32 %v273, 1.442695
    %v291 = vpow.pop %v290
    %v292 = vmul.f32 %v274, 1.442695
    %v293 = vpow.pop %v292
    %v294 = vmul.f32 %v275, 1.442695
    %v295 = vpow.pop %v294
    %v296 = vmul.f32 %v276, 1.442695
    %v297 = vpow.pop %v296
    %v298 = vmul.f32 %v277, 1.442695
    %v299 = vpow.pop %v298
    %v300 = vmul.f32 %v278, 1.442695
    %v301 = vpow.pop %v300
    %v302 = vmul.f32 %v279, 1.442695
    %v303 = vpow.pop %v302
    %v304 = vmul.f32 %v280, 1.442695
    %v305 = vpow.pop %v304
    %v306 = vmul.f32 %v281, 1.442695
    %v307 = vpow.pop %v306
    %v308 = vmul.f32 %v282, 1.442695
    %v309 = vpow.pop %v308
    %v310 = vmul.f32 %v283, 1.442695
    %v311 = vpow.pop %v310
    %v312 = vmul.f32 %v284, 1.442695
    %v313 = vpow.pop %v312
    %v314 = vmul.f32 %v285, 1.442695
    %v315 = vpow.pop %v314
    %v316 = vmul.f32 %v286, 1.442695
    %v317 = vpow.pop %v316
    %v318 = vmul.f32 %v287, 1.442695
    %v319 = vpow.pop %v318
    %v320 = vrcp.pop %v289
    %v321 = vrcp.pop %v291
    %v322 = vrcp.pop %v293
    %v323 = vrcp.pop %v295
    %v324 = vrcp.pop %v297
    %v325 = vrcp.pop %v299
    %v326 = vrcp.pop %v301
    %v327 = vrcp.pop %v303
    %v328 = vrcp.pop %v305
    %v329 = vrcp.pop %v307
    %v330 = vrcp.pop %v309
    %v331 = vrcp.pop %v311
    %v332 = vrcp.pop %v313
    %v333 = vrcp.pop %v315
    %v334 = vrcp.pop %v317
    %v335 = vrcp.pop %v319
    %v336 = vsel %vm224, %v320, 0.0
    %v337 = vsel %vm225, %v321, 0.0
    %v338 = vsel %vm226, %v322, 0.0
    %v339 = vsel %vm227, %v323, 0.0
    %v340 = vsel %vm228, %v324, 0.0
    %v341 = vsel %vm229, %v325, 0.0
    %v342 = vsel %vm230, %v326, 0.0
    %v343 = vsel %vm231, %v327, 0.0
    %v344 = vsel %vm232, %v328, 0.0
    %v345 = vsel %vm233, %v329, 0.0
    %v346 = vsel %vm234, %v330, 0.0
    %v347 = vsel %vm235, %v331, 0.0
    %v348 = vsel %vm236, %v332, 0.0
    %v349 = vsel %vm237, %v333, 0.0
    %v350 = vsel %vm238, %v334, 0.0
    %v351 = vsel %vm239, %v335, 0.0
    %352 = vadd.xlane.f32.xlu0 %v336
    %v353 = vpop.xlane.xlu0 %352
    %354 = vadd.xlane.f32.xlu0 %v337
    %v355 = vpop.xlane.xlu0 %354
    %356 = vadd.xlane.f32.xlu0 %v338
    %v357 = vpop.xlane.xlu0 %356
    %358 = vadd.xlane.f32.xlu0 %v339
    %v359 = vpop.xlane.xlu0 %358
    %360 = vadd.xlane.f32.xlu0 %v340
    %v361 = vpop.xlane.xlu0 %360
    %362 = vadd.xlane.f32.xlu0 %v341
    %v363 = vpop.xlane.xlu0 %362
    %364 = vadd.xlane.f32.xlu0 %v342
    %v365 = vpop.xlane.xlu0 %364
    %366 = vadd.xlane.f32.xlu0 %v343
    %v367 = vpop.xlane.xlu0 %366
    %368 = vadd.xlane.f32.xlu0 %v344
    %v369 = vpop.xlane.xlu0 %368
    %370 = vadd.xlane.f32.xlu0 %v345
    %v371 = vpop.xlane.xlu0 %370
    %372 = vadd.xlane.f32.xlu0 %v346
    %v373 = vpop.xlane.xlu0 %372
    %374 = vadd.xlane.f32.xlu0 %v347
    %v375 = vpop.xlane.xlu0 %374
    %376 = vadd.xlane.f32.xlu0 %v348
    %v377 = vpop.xlane.xlu0 %376
    %378 = vadd.xlane.f32.xlu0 %v349
    %v379 = vpop.xlane.xlu0 %378
    %380 = vadd.xlane.f32.xlu0 %v350
    %v381 = vpop.xlane.xlu0 %380
    %382 = vadd.xlane.f32.xlu0 %v351
    %v383 = vpop.xlane.xlu0 %382
    %v384 = vrcp.pop %v353
    %v385 = vrcp.pop %v355
    %v386 = vrcp.pop %v357
    %v387 = vrcp.pop %v359
    %v388 = vrcp.pop %v361
    %v389 = vrcp.pop %v363
    %v390 = vrcp.pop %v365
    %v391 = vrcp.pop %v367
    %v392 = vrcp.pop %v369
    %v393 = vrcp.pop %v371
    %v394 = vrcp.pop %v373
    %v395 = vrcp.pop %v375
    %v396 = vrcp.pop %v377
    %v397 = vrcp.pop %v379
    %v398 = vrcp.pop %v381
    %v399 = vrcp.pop %v383
    %v400 = vmul.f32 %v336, %v384
    %v401 = vmul.f32 %v337, %v385
    %v402 = vmul.f32 %v338, %v386
    %v403 = vmul.f32 %v339, %v387
    %v404 = vmul.f32 %v340, %v388
    %v405 = vmul.f32 %v341, %v389
    %v406 = vmul.f32 %v342, %v390
    %v407 = vmul.f32 %v343, %v391
    %v408 = vmul.f32 %v344, %v392
    %v409 = vmul.f32 %v345, %v393
    %v410 = vmul.f32 %v346, %v394
    %v411 = vmul.f32 %v347, %v395
    %v412 = vmul.f32 %v348, %v396
    %v413 = vmul.f32 %v349, %v397
    %v414 = vmul.f32 %v350, %v398
    %v415 = vmul.f32 %v351, %v399
    %v416 = vpack.c.bf16 %v401, %v400
    %v417 = vpack.c.bf16 %v403, %v402
    %v418 = vpack.c.bf16 %v405, %v404
    %v419 = vpack.c.bf16 %v407, %v406
    %v420 = vpack.c.bf16 %v409, %v408
    %v421 = vpack.c.bf16 %v411, %v410
    %v422 = vpack.c.bf16 %v413, %v412
    %v423 = vpack.c.bf16 %v415, %v414
    %v424 = vld [vmem:[%s4] sm:$0xf]
    %v425 = vld [vmem:[%s4 + $0x4] sm:$0xf]
    %v426 = vld [vmem:[%s4 + $0x8] sm:$0xf]
    %v427 = vld [vmem:[%s4 + $0xc] sm:$0xf]
    %v428 = vld [vmem:[%s4 + $0x10] sm:$0xf]
    %v429 = vld [vmem:[%s4 + $0x14] sm:$0xf]
    %v430 = vld [vmem:[%s4 + $0x18] sm:$0xf]
    %v431 = vld [vmem:[%s4 + $0x1c] sm:$0xf]
    %v432 = vld [vmem:[%s4 + $0x20] sm:$0xf]
    %v433 = vld [vmem:[%s4 + $0x24] sm:$0xf]
    %v434 = vld [vmem:[%s4 + $0x28] sm:$0xf]
    %v435 = vld [vmem:[%s4 + $0x2c] sm:$0xf]
    %v436 = vld [vmem:[%s4 + $0x30] sm:$0xf]
    %v437 = vld [vmem:[%s4 + $0x34] sm:$0xf]
    %v438 = vld [vmem:[%s4 + $0x38] sm:$0xf]
    %v439 = vld [vmem:[%s4 + $0x3c] sm:$0xf]
    %v456 = vunpack.c.l.b16 %v424
    %v457 = vunpack.c.l.b16 %v425
    %v458 = vunpack.c.l.b16 %v426
    %v459 = vunpack.c.l.b16 %v427
    %v460 = vunpack.c.l.b16 %v428
    %v461 = vunpack.c.l.b16 %v429
    %v462 = vunpack.c.l.b16 %v430
    %v463 = vunpack.c.l.b16 %v431
    %v464 = vunpack.c.l.b16 %v432
    %v465 = vunpack.c.l.b16 %v433
    %v466 = vunpack.c.l.b16 %v434
    %v467 = vunpack.c.l.b16 %v435
    %v468 = vunpack.c.l.b16 %v436
    %v469 = vunpack.c.l.b16 %v437
    %v470 = vunpack.c.l.b16 %v438
    %v471 = vunpack.c.l.b16 %v439
    %v472 = vpack.c.b16 %v457, %v456
    %v473 = vpack.c.b16 %v459, %v458
    %v474 = vpack.c.b16 %v461, %v460
    %v475 = vpack.c.b16 %v463, %v462
    %v476 = vpack.c.b16 %v465, %v464
    %v477 = vpack.c.b16 %v467, %v466
    %v478 = vpack.c.b16 %v469, %v468
    %v479 = vpack.c.b16 %v471, %v470
    %488 = vmatpush.bf16.msra.mxu0 %v479
    %489 = vmatpush.bf16.msra.mxu0 %v478
    %490 = vmatpush.bf16.msra.mxu0 %v477
    %491 = vmatpush.bf16.msra.mxu0 %v476
    %492 = vmatpush.bf16.msra.mxu0 %v475
    %493 = vmatpush.bf16.msra.mxu0 %v474
    %494 = vmatpush.bf16.msra.mxu0 %v473
    %495 = vmatpush.bf16.msra.mxu0 %v472
    %496 = vmatmul.bf16.gmra.mxu0 %v416
    %v497 = vpop.f32.mrf.mxu0
    %v498 = vadd.f32 0.0, %v497
    %v499 = vpop.f32.mrf.mxu0
    %v500 = vadd.f32 0.0, %v499
    %501 = vmatmul.bf16.gmra.mxu0 %v417
    %v502 = vpop.f32.mrf.mxu0
    %v503 = vadd.f32 0.0, %v502
    %v504 = vpop.f32.mrf.mxu0
    %v505 = vadd.f32 0.0, %v504
    %506 = vmatmul.bf16.gmra.mxu0 %v418
    %v507 = vpop.f32.mrf.mxu0
    %v508 = vadd.f32 0.0, %v507
    %v509 = vpop.f32.mrf.mxu0
    %v510 = vadd.f32 0.0, %v509
    %511 = vmatmul.bf16.gmra.mxu0 %v419
    %v512 = vpop.f32.mrf.mxu0
    %v513 = vadd.f32 0.0, %v512
    %v514 = vpop.f32.mrf.mxu0
    %v515 = vadd.f32 0.0, %v514
    %516 = vmatmul.bf16.gmra.mxu0 %v420
    %v517 = vpop.f32.mrf.mxu0
    %v518 = vadd.f32 0.0, %v517
    %v519 = vpop.f32.mrf.mxu0
    %v520 = vadd.f32 0.0, %v519
    %521 = vmatmul.bf16.gmra.mxu0 %v421
    %v522 = vpop.f32.mrf.mxu0
    %v523 = vadd.f32 0.0, %v522
    %v524 = vpop.f32.mrf.mxu0
    %v525 = vadd.f32 0.0, %v524
    %526 = vmatmul.bf16.gmra.mxu0 %v422
    %v527 = vpop.f32.mrf.mxu0
    %v528 = vadd.f32 0.0, %v527
    %v529 = vpop.f32.mrf.mxu0
    %v530 = vadd.f32 0.0, %v529
    %531 = vmatmul.bf16.gmra.mxu0 %v423
    %v532 = vpop.f32.mrf.mxu0
    %v533 = vadd.f32 0.0, %v532
    %v534 = vpop.f32.mrf.mxu0
    %v535 = vadd.f32 0.0, %v534
    %536 = vdwg.mxu0
    %s537 = sshra.s32 %s25, 3
    %s538 = sand.u32 %s25, 7
    %s539 = smul.addr %s537, 4
    %s540 = scalar_lea.vmem %s4, %s539
    %v541 = vld [vmem:[%s540] sm:$0xf]
    %v542 = vld [vmem:[%s540 + $0x4] sm:$0xf]
    %v543 = vld [vmem:[%s540 + $0x8] sm:$0xf]
    %v544 = vld [vmem:[%s540 + $0xc] sm:$0xf]
    %v545 = vld [vmem:[%s540 + $0x10] sm:$0xf]
    %v546 = vld [vmem:[%s540 + $0x14] sm:$0xf]
    %v547 = vld [vmem:[%s540 + $0x18] sm:$0xf]
    %v548 = vld [vmem:[%s540 + $0x1c] sm:$0xf]
    %v549 = vld [vmem:[%s540 + $0x20] sm:$0xf]
    %v550 = vld [vmem:[%s540 + $0x24] sm:$0xf]
    %v551 = vld [vmem:[%s540 + $0x28] sm:$0xf]
    %v552 = vld [vmem:[%s540 + $0x2c] sm:$0xf]
    %v553 = vld [vmem:[%s540 + $0x30] sm:$0xf]
    %v554 = vld [vmem:[%s540 + $0x34] sm:$0xf]
    %v555 = vld [vmem:[%s540 + $0x38] sm:$0xf]
    %v556 = vld [vmem:[%s540 + $0x3c] sm:$0xf]
    %v557 = vunpack.c.l.bf16 %v541
    %v558 = vunpack.c.l.bf16 %v542
    %v559 = vunpack.c.l.bf16 %v543
    %v560 = vunpack.c.l.bf16 %v544
    %v561 = vunpack.c.l.bf16 %v545
    %v562 = vunpack.c.l.bf16 %v546
    %v563 = vunpack.c.l.bf16 %v547
    %v564 = vunpack.c.l.bf16 %v548
    %v565 = vunpack.c.l.bf16 %v549
    %v566 = vunpack.c.l.bf16 %v550
    %v567 = vunpack.c.l.bf16 %v551
    %v568 = vunpack.c.l.bf16 %v552
    %v569 = vunpack.c.l.bf16 %v553
    %v570 = vunpack.c.l.bf16 %v554
    %v571 = vunpack.c.l.bf16 %v555
    %v572 = vunpack.c.l.bf16 %v556
    %v573 = vsub.f32 %v557, %v498
    %v574 = vsub.f32 %v558, %v500
    %v575 = vsub.f32 %v559, %v503
    %v576 = vsub.f32 %v560, %v505
    %v577 = vsub.f32 %v561, %v508
    %v578 = vsub.f32 %v562, %v510
    %v579 = vsub.f32 %v563, %v513
    %v580 = vsub.f32 %v564, %v515
    %v581 = vsub.f32 %v565, %v518
    %v582 = vsub.f32 %v566, %v520
    %v583 = vsub.f32 %v567, %v523
    %v584 = vsub.f32 %v568, %v525
    %v585 = vsub.f32 %v569, %v528
    %v586 = vsub.f32 %v570, %v530
    %v587 = vsub.f32 %v571, %v533
    %v588 = vsub.f32 %v572, %v535
    %v589 = vmul.f32 %v573, 0.7
    %v590 = vmul.f32 %v574, 0.7
    %v591 = vmul.f32 %v575, 0.7
    %v592 = vmul.f32 %v576, 0.7
    %v593 = vmul.f32 %v577, 0.7
    %v594 = vmul.f32 %v578, 0.7
    %v595 = vmul.f32 %v579, 0.7
    %v596 = vmul.f32 %v580, 0.7
    %v597 = vmul.f32 %v581, 0.7
    %v598 = vmul.f32 %v582, 0.7
    %v599 = vmul.f32 %v583, 0.7
    %v600 = vmul.f32 %v584, 0.7
    %v601 = vmul.f32 %v585, 0.7
    %v602 = vmul.f32 %v586, 0.7
    %v603 = vmul.f32 %v587, 0.7
    %v604 = vmul.f32 %v588, 0.7
    %v605 = vld [vmem:[%s5] sm:$0xff]
    %v606 = vld [vmem:[%s5 + $0x8] sm:$0xff]
    %v607 = vld [vmem:[%s5 + $0x10] sm:$0xff]
    %v608 = vld [vmem:[%s5 + $0x18] sm:$0xff]
    %v609 = vld [vmem:[%s5 + $0x20] sm:$0xff]
    %v610 = vld [vmem:[%s5 + $0x28] sm:$0xff]
    %v611 = vld [vmem:[%s5 + $0x30] sm:$0xff]
    %v612 = vld [vmem:[%s5 + $0x38] sm:$0xff]
    %v613 = vld [vmem:[%s5 + $0x40] sm:$0xff]
    %v614 = vld [vmem:[%s5 + $0x48] sm:$0xff]
    %v615 = vld [vmem:[%s5 + $0x50] sm:$0xff]
    %v616 = vld [vmem:[%s5 + $0x58] sm:$0xff]
    %v617 = vld [vmem:[%s5 + $0x60] sm:$0xff]
    %v618 = vld [vmem:[%s5 + $0x68] sm:$0xff]
    %v619 = vld [vmem:[%s5 + $0x70] sm:$0xff]
    %v620 = vld [vmem:[%s5 + $0x78] sm:$0xff]
    %v621 = vmul.f32 %v605, 0.3
    %v622 = vmul.f32 %v606, 0.3
    %v623 = vmul.f32 %v607, 0.3
    %v624 = vmul.f32 %v608, 0.3
    %v625 = vmul.f32 %v609, 0.3
    %v626 = vmul.f32 %v610, 0.3
    %v627 = vmul.f32 %v611, 0.3
    %v628 = vmul.f32 %v612, 0.3
    %v629 = vmul.f32 %v613, 0.3
    %v630 = vmul.f32 %v614, 0.3
    %v631 = vmul.f32 %v615, 0.3
    %v632 = vmul.f32 %v616, 0.3
    %v633 = vmul.f32 %v617, 0.3
    %v634 = vmul.f32 %v618, 0.3
    %v635 = vmul.f32 %v619, 0.3
    %v636 = vmul.f32 %v620, 0.3
    %v637 = vadd.f32 %v589, %v621
    %v638 = vadd.f32 %v590, %v622
    %v639 = vadd.f32 %v591, %v623
    %v640 = vadd.f32 %v592, %v624
    %v641 = vadd.f32 %v593, %v625
    %v642 = vadd.f32 %v594, %v626
    %v643 = vadd.f32 %v595, %v627
    %v644 = vadd.f32 %v596, %v628
    %v645 = vadd.f32 %v597, %v629
    %v646 = vadd.f32 %v598, %v630
    %v647 = vadd.f32 %v599, %v631
    %v648 = vadd.f32 %v600, %v632
    %v649 = vadd.f32 %v601, %v633
    %v650 = vadd.f32 %v602, %v634
    %v651 = vadd.f32 %v603, %v635
    %v652 = vadd.f32 %v604, %v636
    %vm653 = vcmp.lt.s32.totalorder %v223, 10
    %v654 = vsel %vm653, 1, 0
    %vm655 = vcmp.eq.s32.totalorder %v654, 1
    %v656 = vsel %vm655, %v637, -inf
    %v657 = vsel %vm655, %v638, -inf
    %v658 = vsel %vm655, %v639, -inf
    %v659 = vsel %vm655, %v640, -inf
    %v660 = vsel %vm655, %v641, -inf
    %v661 = vsel %vm655, %v642, -inf
    %v662 = vsel %vm655, %v643, -inf
    %v663 = vsel %vm655, %v644, -inf
    %v664 = vsel %vm655, %v645, -inf
    %v665 = vsel %vm655, %v646, -inf
    %v666 = vsel %vm655, %v647, -inf
    %v667 = vsel %vm655, %v648, -inf
    %v668 = vsel %vm655, %v649, -inf
    %v669 = vsel %vm655, %v650, -inf
    %v670 = vsel %vm655, %v651, -inf
    %v671 = vsel %vm655, %v652, -inf
    %672 = vmax.xlane.f32.xlu0 %v656
    %v673 = vpop.xlane.xlu0 %672
    %674 = vmax.xlane.f32.xlu0 %v657
    %v675 = vpop.xlane.xlu0 %674
    %676 = vmax.xlane.f32.xlu0 %v658
    %v677 = vpop.xlane.xlu0 %676
    %678 = vmax.xlane.f32.xlu0 %v659
    %v679 = vpop.xlane.xlu0 %678
    %680 = vmax.xlane.f32.xlu0 %v660
    %v681 = vpop.xlane.xlu0 %680
    %682 = vmax.xlane.f32.xlu0 %v661
    %v683 = vpop.xlane.xlu0 %682
    %684 = vmax.xlane.f32.xlu0 %v662
    %v685 = vpop.xlane.xlu0 %684
    %686 = vmax.xlane.f32.xlu0 %v663
    %v687 = vpop.xlane.xlu0 %686
    %688 = vmax.xlane.f32.xlu0 %v664
    %v689 = vpop.xlane.xlu0 %688
    %690 = vmax.xlane.f32.xlu0 %v665
    %v691 = vpop.xlane.xlu0 %690
    %692 = vmax.xlane.f32.xlu0 %v666
    %v693 = vpop.xlane.xlu0 %692
    %694 = vmax.xlane.f32.xlu0 %v667
    %v695 = vpop.xlane.xlu0 %694
    %696 = vmax.xlane.f32.xlu0 %v668
    %v697 = vpop.xlane.xlu0 %696
    %698 = vmax.xlane.f32.xlu0 %v669
    %v699 = vpop.xlane.xlu0 %698
    %700 = vmax.xlane.f32.xlu0 %v670
    %v701 = vpop.xlane.xlu0 %700
    %702 = vmax.xlane.f32.xlu0 %v671
    %v703 = vpop.xlane.xlu0 %702
    %v704 = vsub.f32 %v656, %v673
    %v705 = vsub.f32 %v657, %v675
    %v706 = vsub.f32 %v658, %v677
    %v707 = vsub.f32 %v659, %v679
    %v708 = vsub.f32 %v660, %v681
    %v709 = vsub.f32 %v661, %v683
    %v710 = vsub.f32 %v662, %v685
    %v711 = vsub.f32 %v663, %v687
    %v712 = vsub.f32 %v664, %v689
    %v713 = vsub.f32 %v665, %v691
    %v714 = vsub.f32 %v666, %v693
    %v715 = vsub.f32 %v667, %v695
    %v716 = vsub.f32 %v668, %v697
    %v717 = vsub.f32 %v669, %v699
    %v718 = vsub.f32 %v670, %v701
    %v719 = vsub.f32 %v671, %v703
    %v720 = vmul.f32 %v704, 1.442695
    %v721 = vpow.pop %v720
    %v722 = vmul.f32 %v705, 1.442695
    %v723 = vpow.pop %v722
    %v724 = vmul.f32 %v706, 1.442695
    %v725 = vpow.pop %v724
    %v726 = vmul.f32 %v707, 1.442695
    %v727 = vpow.pop %v726
    %v728 = vmul.f32 %v708, 1.442695
    %v729 = vpow.pop %v728
    %v730 = vmul.f32 %v709, 1.442695
    %v731 = vpow.pop %v730
    %v732 = vmul.f32 %v710, 1.442695
    %v733 = vpow.pop %v732
    %v734 = vmul.f32 %v711, 1.442695
    %v735 = vpow.pop %v734
    %v736 = vmul.f32 %v712, 1.442695
    %v737 = vpow.pop %v736
    %v738 = vmul.f32 %v713, 1.442695
    %v739 = vpow.pop %v738
    %v740 = vmul.f32 %v714, 1.442695
    %v741 = vpow.pop %v740
    %v742 = vmul.f32 %v715, 1.442695
    %v743 = vpow.pop %v742
    %v744 = vmul.f32 %v716, 1.442695
    %v745 = vpow.pop %v744
    %v746 = vmul.f32 %v717, 1.442695
    %v747 = vpow.pop %v746
    %v748 = vmul.f32 %v718, 1.442695
    %v749 = vpow.pop %v748
    %v750 = vmul.f32 %v719, 1.442695
    %v751 = vpow.pop %v750
    %752 = vadd.xlane.f32.xlu0 %v721
    %v753 = vpop.xlane.xlu0 %752
    %754 = vadd.xlane.f32.xlu0 %v723
    %v755 = vpop.xlane.xlu0 %754
    %756 = vadd.xlane.f32.xlu0 %v725
    %v757 = vpop.xlane.xlu0 %756
    %758 = vadd.xlane.f32.xlu0 %v727
    %v759 = vpop.xlane.xlu0 %758
    %760 = vadd.xlane.f32.xlu0 %v729
    %v761 = vpop.xlane.xlu0 %760
    %762 = vadd.xlane.f32.xlu0 %v731
    %v763 = vpop.xlane.xlu0 %762
    %764 = vadd.xlane.f32.xlu0 %v733
    %v765 = vpop.xlane.xlu0 %764
    %766 = vadd.xlane.f32.xlu0 %v735
    %v767 = vpop.xlane.xlu0 %766
    %768 = vadd.xlane.f32.xlu0 %v737
    %v769 = vpop.xlane.xlu0 %768
    %770 = vadd.xlane.f32.xlu0 %v739
    %v771 = vpop.xlane.xlu0 %770
    %772 = vadd.xlane.f32.xlu0 %v741
    %v773 = vpop.xlane.xlu0 %772
    %774 = vadd.xlane.f32.xlu0 %v743
    %v775 = vpop.xlane.xlu0 %774
    %776 = vadd.xlane.f32.xlu0 %v745
    %v777 = vpop.xlane.xlu0 %776
    %778 = vadd.xlane.f32.xlu0 %v747
    %v779 = vpop.xlane.xlu0 %778
    %780 = vadd.xlane.f32.xlu0 %v749
    %v781 = vpop.xlane.xlu0 %780
    %782 = vadd.xlane.f32.xlu0 %v751
    %v783 = vpop.xlane.xlu0 %782
    %v784 = vrcp.pop %v753
    %v785 = vrcp.pop %v755
    %v786 = vrcp.pop %v757
    %v787 = vrcp.pop %v759
    %v788 = vrcp.pop %v761
    %v789 = vrcp.pop %v763
    %v790 = vrcp.pop %v765
    %v791 = vrcp.pop %v767
    %v792 = vrcp.pop %v769
    %v793 = vrcp.pop %v771
    %v794 = vrcp.pop %v773
    %v795 = vrcp.pop %v775
    %v796 = vrcp.pop %v777
    %v797 = vrcp.pop %v779
    %v798 = vrcp.pop %v781
    %v799 = vrcp.pop %v783
    %v800 = vmul.f32 %v721, %v784
    %v801 = vmul.f32 %v723, %v785
    %v802 = vmul.f32 %v725, %v786
    %v803 = vmul.f32 %v727, %v787
    %v804 = vmul.f32 %v729, %v788
    %v805 = vmul.f32 %v731, %v789
    %v806 = vmul.f32 %v733, %v790
    %v807 = vmul.f32 %v735, %v791
    %v808 = vmul.f32 %v737, %v792
    %v809 = vmul.f32 %v739, %v793
    %v810 = vmul.f32 %v741, %v794
    %v811 = vmul.f32 %v743, %v795
    %v812 = vmul.f32 %v745, %v796
    %v813 = vmul.f32 %v747, %v797
    %v814 = vmul.f32 %v749, %v798
    %v815 = vmul.f32 %v751, %v799
    %v816 = vsel %vm224, %v289, 0.0
    %v817 = vsel %vm225, %v291, 0.0
    %v818 = vsel %vm226, %v293, 0.0
    %v819 = vsel %vm227, %v295, 0.0
    %v820 = vsel %vm228, %v297, 0.0
    %v821 = vsel %vm229, %v299, 0.0
    %v822 = vsel %vm230, %v301, 0.0
    %v823 = vsel %vm231, %v303, 0.0
    %v824 = vsel %vm232, %v305, 0.0
    %v825 = vsel %vm233, %v307, 0.0
    %v826 = vsel %vm234, %v309, 0.0
    %v827 = vsel %vm235, %v311, 0.0
    %v828 = vsel %vm236, %v313, 0.0
    %v829 = vsel %vm237, %v315, 0.0
    %v830 = vsel %vm238, %v317, 0.0
    %v831 = vsel %vm239, %v319, 0.0
    %832 = vadd.xlane.f32.xlu0 %v816
    %v833 = vpop.xlane.xlu0 %832
    %834 = vadd.xlane.f32.xlu0 %v817
    %v835 = vpop.xlane.xlu0 %834
    %836 = vadd.xlane.f32.xlu0 %v818
    %v837 = vpop.xlane.xlu0 %836
    %838 = vadd.xlane.f32.xlu0 %v819
    %v839 = vpop.xlane.xlu0 %838
    %840 = vadd.xlane.f32.xlu0 %v820
    %v841 = vpop.xlane.xlu0 %840
    %842 = vadd.xlane.f32.xlu0 %v821
    %v843 = vpop.xlane.xlu0 %842
    %844 = vadd.xlane.f32.xlu0 %v822
    %v845 = vpop.xlane.xlu0 %844
    %846 = vadd.xlane.f32.xlu0 %v823
    %v847 = vpop.xlane.xlu0 %846
    %848 = vadd.xlane.f32.xlu0 %v824
    %v849 = vpop.xlane.xlu0 %848
    %850 = vadd.xlane.f32.xlu0 %v825
    %v851 = vpop.xlane.xlu0 %850
    %852 = vadd.xlane.f32.xlu0 %v826
    %v853 = vpop.xlane.xlu0 %852
    %854 = vadd.xlane.f32.xlu0 %v827
    %v855 = vpop.xlane.xlu0 %854
    %856 = vadd.xlane.f32.xlu0 %v828
    %v857 = vpop.xlane.xlu0 %856
    %858 = vadd.xlane.f32.xlu0 %v829
    %v859 = vpop.xlane.xlu0 %858
    %860 = vadd.xlane.f32.xlu0 %v830
    %v861 = vpop.xlane.xlu0 %860
    %862 = vadd.xlane.f32.xlu0 %v831
    %v863 = vpop.xlane.xlu0 %862
    %v864 = vlog2.pop %v833
    %v865 = vmul.f32 %v864, 0.6931472
    %v866 = vlog2.pop %v835
    %v867 = vmul.f32 %v866, 0.6931472
    %v868 = vlog2.pop %v837
    %v869 = vmul.f32 %v868, 0.6931472
    %v870 = vlog2.pop %v839
    %v871 = vmul.f32 %v870, 0.6931472
    %v872 = vlog2.pop %v841
    %v873 = vmul.f32 %v872, 0.6931472
    %v874 = vlog2.pop %v843
    %v875 = vmul.f32 %v874, 0.6931472
    %v876 = vlog2.pop %v845
    %v877 = vmul.f32 %v876, 0.6931472
    %v878 = vlog2.pop %v847
    %v879 = vmul.f32 %v878, 0.6931472
    %v880 = vlog2.pop %v849
    %v881 = vmul.f32 %v880, 0.6931472
    %v882 = vlog2.pop %v851
    %v883 = vmul.f32 %v882, 0.6931472
    %v884 = vlog2.pop %v853
    %v885 = vmul.f32 %v884, 0.6931472
    %v886 = vlog2.pop %v855
    %v887 = vmul.f32 %v886, 0.6931472
    %v888 = vlog2.pop %v857
    %v889 = vmul.f32 %v888, 0.6931472
    %v890 = vlog2.pop %v859
    %v891 = vmul.f32 %v890, 0.6931472
    %v892 = vlog2.pop %v861
    %v893 = vmul.f32 %v892, 0.6931472
    %v894 = vlog2.pop %v863
    %v895 = vmul.f32 %v894, 0.6931472
    %v896 = vsub.f32 %v272, %v865
    %v897 = vsub.f32 %v273, %v867
    %v898 = vsub.f32 %v274, %v869
    %v899 = vsub.f32 %v275, %v871
    %v900 = vsub.f32 %v276, %v873
    %v901 = vsub.f32 %v277, %v875
    %v902 = vsub.f32 %v278, %v877
    %v903 = vsub.f32 %v279, %v879
    %v904 = vsub.f32 %v280, %v881
    %v905 = vsub.f32 %v281, %v883
    %v906 = vsub.f32 %v282, %v885
    %v907 = vsub.f32 %v283, %v887
    %v908 = vsub.f32 %v284, %v889
    %v909 = vsub.f32 %v285, %v891
    %v910 = vsub.f32 %v286, %v893
    %v911 = vsub.f32 %v287, %v895
    %v912 = vld [vmem:[%s2] sm:$0xff]
    %v913 = vld [vmem:[%s2 + $0x8] sm:$0xff]
    %v914 = vld [vmem:[%s2 + $0x10] sm:$0xff]
    %v915 = vld [vmem:[%s2 + $0x18] sm:$0xff]
    %v916 = vld [vmem:[%s2 + $0x20] sm:$0xff]
    %v917 = vld [vmem:[%s2 + $0x28] sm:$0xff]
    %v918 = vld [vmem:[%s2 + $0x30] sm:$0xff]
    %v919 = vld [vmem:[%s2 + $0x38] sm:$0xff]
    %v920 = vld [vmem:[%s2 + $0x40] sm:$0xff]
    %v921 = vld [vmem:[%s2 + $0x48] sm:$0xff]
    %v922 = vld [vmem:[%s2 + $0x50] sm:$0xff]
    %v923 = vld [vmem:[%s2 + $0x58] sm:$0xff]
    %v924 = vld [vmem:[%s2 + $0x60] sm:$0xff]
    %v925 = vld [vmem:[%s2 + $0x68] sm:$0xff]
    %v926 = vld [vmem:[%s2 + $0x70] sm:$0xff]
    %v927 = vld [vmem:[%s2 + $0x78] sm:$0xff]
    %v928 = vld [vmem:[%s3] sm:$0x1]
    %929 = vset.pattern.permute.xlu0 0
    %930 = vperm.xlu0 %929, %v912
    %v931 = vpop.permute.xlu0 %930
    %932 = vset.pattern.permute.xlu0 0
    %933 = vperm.xlu0 %932, %v913
    %v934 = vpop.permute.xlu0 %933
    %935 = vset.pattern.permute.xlu0 0
    %936 = vperm.xlu0 %935, %v914
    %v937 = vpop.permute.xlu0 %936
    %938 = vset.pattern.permute.xlu0 0
    %939 = vperm.xlu0 %938, %v915
    %v940 = vpop.permute.xlu0 %939
    %941 = vset.pattern.permute.xlu0 0
    %942 = vperm.xlu0 %941, %v916
    %v943 = vpop.permute.xlu0 %942
    %944 = vset.pattern.permute.xlu0 0
    %945 = vperm.xlu0 %944, %v917
    %v946 = vpop.permute.xlu0 %945
    %947 = vset.pattern.permute.xlu0 0
    %948 = vperm.xlu0 %947, %v918
    %v949 = vpop.permute.xlu0 %948
    %950 = vset.pattern.permute.xlu0 0
    %951 = vperm.xlu0 %950, %v919
    %v952 = vpop.permute.xlu0 %951
    %953 = vset.pattern.permute.xlu0 0
    %954 = vperm.xlu0 %953, %v920
    %v955 = vpop.permute.xlu0 %954
    %956 = vset.pattern.permute.xlu0 0
    %957 = vperm.xlu0 %956, %v921
    %v958 = vpop.permute.xlu0 %957
    %959 = vset.pattern.permute.xlu0 0
    %960 = vperm.xlu0 %959, %v922
    %v961 = vpop.permute.xlu0 %960
    %962 = vset.pattern.permute.xlu0 0
    %963 = vperm.xlu0 %962, %v923
    %v964 = vpop.permute.xlu0 %963
    %965 = vset.pattern.permute.xlu0 0
    %966 = vperm.xlu0 %965, %v924
    %v967 = vpop.permute.xlu0 %966
    %968 = vset.pattern.permute.xlu0 0
    %969 = vperm.xlu0 %968, %v925
    %v970 = vpop.permute.xlu0 %969
    %971 = vset.pattern.permute.xlu0 0
    %972 = vperm.xlu0 %971, %v926
    %v973 = vpop.permute.xlu0 %972
    %974 = vset.pattern.permute.xlu0 0
    %975 = vperm.xlu0 %974, %v927
    %v976 = vpop.permute.xlu0 %975
    %v977 = vperm.slane %v928, 0
    %vm978 = vcmp.eq.s32.totalorder %v931, %v977
    %vm979 = vcmp.eq.s32.totalorder %v934, %v977
    %vm980 = vcmp.eq.s32.totalorder %v937, %v977
    %vm981 = vcmp.eq.s32.totalorder %v940, %v977
    %vm982 = vcmp.eq.s32.totalorder %v943, %v977
    %vm983 = vcmp.eq.s32.totalorder %v946, %v977
    %vm984 = vcmp.eq.s32.totalorder %v949, %v977
    %vm985 = vcmp.eq.s32.totalorder %v952, %v977
    %vm986 = vcmp.eq.s32.totalorder %v955, %v977
    %vm987 = vcmp.eq.s32.totalorder %v958, %v977
    %vm988 = vcmp.eq.s32.totalorder %v961, %v977
    %vm989 = vcmp.eq.s32.totalorder %v964, %v977
    %vm990 = vcmp.eq.s32.totalorder %v967, %v977
    %vm991 = vcmp.eq.s32.totalorder %v970, %v977
    %vm992 = vcmp.eq.s32.totalorder %v973, %v977
    %vm993 = vcmp.eq.s32.totalorder %v976, %v977
    %vm994 = vmand %vm978, %vm224
    %vm995 = vmand %vm979, %vm225
    %vm996 = vmand %vm980, %vm226
    %vm997 = vmand %vm981, %vm227
    %vm998 = vmand %vm982, %vm228
    %vm999 = vmand %vm983, %vm229
    %vm1000 = vmand %vm984, %vm230
    %vm1001 = vmand %vm985, %vm231
    %vm1002 = vmand %vm986, %vm232
    %vm1003 = vmand %vm987, %vm233
    %vm1004 = vmand %vm988, %vm234
    %vm1005 = vmand %vm989, %vm235
    %vm1006 = vmand %vm990, %vm236
    %vm1007 = vmand %vm991, %vm237
    %vm1008 = vmand %vm992, %vm238
    %vm1009 = vmand %vm993, %vm239
    %v1010 = vsel %vm994, %v896, 0.0
    %v1011 = vsel %vm995, %v897, 0.0
    %v1012 = vsel %vm996, %v898, 0.0
    %v1013 = vsel %vm997, %v899, 0.0
    %v1014 = vsel %vm998, %v900, 0.0
    %v1015 = vsel %vm999, %v901, 0.0
    %v1016 = vsel %vm1000, %v902, 0.0
    %v1017 = vsel %vm1001, %v903, 0.0
    %v1018 = vsel %vm1002, %v904, 0.0
    %v1019 = vsel %vm1003, %v905, 0.0
    %v1020 = vsel %vm1004, %v906, 0.0
    %v1021 = vsel %vm1005, %v907, 0.0
    %v1022 = vsel %vm1006, %v908, 0.0
    %v1023 = vsel %vm1007, %v909, 0.0
    %v1024 = vsel %vm1008, %v910, 0.0
    %v1025 = vsel %vm1009, %v911, 0.0
    %1026 = vadd.xlane.f32.xlu0 %v1010
    %v1027 = vpop.xlane.xlu0 %1026
    %1028 = vadd.xlane.f32.xlu0 %v1011
    %v1029 = vpop.xlane.xlu0 %1028
    %1030 = vadd.xlane.f32.xlu0 %v1012
    %v1031 = vpop.xlane.xlu0 %1030
    %1032 = vadd.xlane.f32.xlu0 %v1013
    %v1033 = vpop.xlane.xlu0 %1032
    %1034 = vadd.xlane.f32.xlu0 %v1014
    %v1035 = vpop.xlane.xlu0 %1034
    %1036 = vadd.xlane.f32.xlu0 %v1015
    %v1037 = vpop.xlane.xlu0 %1036
    %1038 = vadd.xlane.f32.xlu0 %v1016
    %v1039 = vpop.xlane.xlu0 %1038
    %1040 = vadd.xlane.f32.xlu0 %v1017
    %v1041 = vpop.xlane.xlu0 %1040
    %1042 = vadd.xlane.f32.xlu0 %v1018
    %v1043 = vpop.xlane.xlu0 %1042
    %1044 = vadd.xlane.f32.xlu0 %v1019
    %v1045 = vpop.xlane.xlu0 %1044
    %1046 = vadd.xlane.f32.xlu0 %v1020
    %v1047 = vpop.xlane.xlu0 %1046
    %1048 = vadd.xlane.f32.xlu0 %v1021
    %v1049 = vpop.xlane.xlu0 %1048
    %1050 = vadd.xlane.f32.xlu0 %v1022
    %v1051 = vpop.xlane.xlu0 %1050
    %1052 = vadd.xlane.f32.xlu0 %v1023
    %v1053 = vpop.xlane.xlu0 %1052
    %1054 = vadd.xlane.f32.xlu0 %v1024
    %v1055 = vpop.xlane.xlu0 %1054
    %1056 = vadd.xlane.f32.xlu0 %v1025
    %v1057 = vpop.xlane.xlu0 %1056
    %v1058 = vsel %vm994, 1.0, 0.0
    %v1059 = vsel %vm995, 1.0, 0.0
    %v1060 = vsel %vm996, 1.0, 0.0
    %v1061 = vsel %vm997, 1.0, 0.0
    %v1062 = vsel %vm998, 1.0, 0.0
    %v1063 = vsel %vm999, 1.0, 0.0
    %v1064 = vsel %vm1000, 1.0, 0.0
    %v1065 = vsel %vm1001, 1.0, 0.0
    %v1066 = vsel %vm1002, 1.0, 0.0
    %v1067 = vsel %vm1003, 1.0, 0.0
    %v1068 = vsel %vm1004, 1.0, 0.0
    %v1069 = vsel %vm1005, 1.0, 0.0
    %v1070 = vsel %vm1006, 1.0, 0.0
    %v1071 = vsel %vm1007, 1.0, 0.0
    %v1072 = vsel %vm1008, 1.0, 0.0
    %v1073 = vsel %vm1009, 1.0, 0.0
    %1074 = vadd.xlane.f32.xlu0 %v1058
    %v1075 = vpop.xlane.xlu0 %1074
    %1076 = vadd.xlane.f32.xlu0 %v1059
    %v1077 = vpop.xlane.xlu0 %1076
    %1078 = vadd.xlane.f32.xlu0 %v1060
    %v1079 = vpop.xlane.xlu0 %1078
    %1080 = vadd.xlane.f32.xlu0 %v1061
    %v1081 = vpop.xlane.xlu0 %1080
    %1082 = vadd.xlane.f32.xlu0 %v1062
    %v1083 = vpop.xlane.xlu0 %1082
    %1084 = vadd.xlane.f32.xlu0 %v1063
    %v1085 = vpop.xlane.xlu0 %1084
    %1086 = vadd.xlane.f32.xlu0 %v1064
    %v1087 = vpop.xlane.xlu0 %1086
    %1088 = vadd.xlane.f32.xlu0 %v1065
    %v1089 = vpop.xlane.xlu0 %1088
    %1090 = vadd.xlane.f32.xlu0 %v1066
    %v1091 = vpop.xlane.xlu0 %1090
    %1092 = vadd.xlane.f32.xlu0 %v1067
    %v1093 = vpop.xlane.xlu0 %1092
    %1094 = vadd.xlane.f32.xlu0 %v1068
    %v1095 = vpop.xlane.xlu0 %1094
    %1096 = vadd.xlane.f32.xlu0 %v1069
    %v1097 = vpop.xlane.xlu0 %1096
    %1098 = vadd.xlane.f32.xlu0 %v1070
    %v1099 = vpop.xlane.xlu0 %1098
    %1100 = vadd.xlane.f32.xlu0 %v1071
    %v1101 = vpop.xlane.xlu0 %1100
    %1102 = vadd.xlane.f32.xlu0 %v1072
    %v1103 = vpop.xlane.xlu0 %1102
    %1104 = vadd.xlane.f32.xlu0 %v1073
    %v1105 = vpop.xlane.xlu0 %1104
    %v1106 = vmul.f32 %v1027, -1.0
    %v1107 = vmul.f32 %v1029, -1.0
    %v1108 = vmul.f32 %v1031, -1.0
    %v1109 = vmul.f32 %v1033, -1.0
    %v1110 = vmul.f32 %v1035, -1.0
    %v1111 = vmul.f32 %v1037, -1.0
    %v1112 = vmul.f32 %v1039, -1.0
    %v1113 = vmul.f32 %v1041, -1.0
    %v1114 = vmul.f32 %v1043, -1.0
    %v1115 = vmul.f32 %v1045, -1.0
    %v1116 = vmul.f32 %v1047, -1.0
    %v1117 = vmul.f32 %v1049, -1.0
    %v1118 = vmul.f32 %v1051, -1.0
    %v1119 = vmul.f32 %v1053, -1.0
    %v1120 = vmul.f32 %v1055, -1.0
    %v1121 = vmul.f32 %v1057, -1.0
    %v1122 = vadd.f32 %v1075, 1e-05
    %v1123 = vadd.f32 %v1077, 1e-05
    %v1124 = vadd.f32 %v1079, 1e-05
    %v1125 = vadd.f32 %v1081, 1e-05
    %v1126 = vadd.f32 %v1083, 1e-05
    %v1127 = vadd.f32 %v1085, 1e-05
    %v1128 = vadd.f32 %v1087, 1e-05
    %v1129 = vadd.f32 %v1089, 1e-05
    %v1130 = vadd.f32 %v1091, 1e-05
    %v1131 = vadd.f32 %v1093, 1e-05
    %v1132 = vadd.f32 %v1095, 1e-05
    %v1133 = vadd.f32 %v1097, 1e-05
    %v1134 = vadd.f32 %v1099, 1e-05
    %v1135 = vadd.f32 %v1101, 1e-05
    %v1136 = vadd.f32 %v1103, 1e-05
    %v1137 = vadd.f32 %v1105, 1e-05
    %v1138 = vrcp.pop %v1122
    %v1139 = vrcp.pop %v1123
    %v1140 = vrcp.pop %v1124
    %v1141 = vrcp.pop %v1125
    %v1142 = vrcp.pop %v1126
    %v1143 = vrcp.pop %v1127
    %v1144 = vrcp.pop %v1128
    %v1145 = vrcp.pop %v1129
    %v1146 = vrcp.pop %v1130
    %v1147 = vrcp.pop %v1131
    %v1148 = vrcp.pop %v1132
    %v1149 = vrcp.pop %v1133
    %v1150 = vrcp.pop %v1134
    %v1151 = vrcp.pop %v1135
    %v1152 = vrcp.pop %v1136
    %v1153 = vrcp.pop %v1137
    %v1154 = vmul.f32 %v1106, %v1138
    %v1155 = vmul.f32 %v1107, %v1139
    %v1156 = vmul.f32 %v1108, %v1140
    %v1157 = vmul.f32 %v1109, %v1141
    %v1158 = vmul.f32 %v1110, %v1142
    %v1159 = vmul.f32 %v1111, %v1143
    %v1160 = vmul.f32 %v1112, %v1144
    %v1161 = vmul.f32 %v1113, %v1145
    %v1162 = vmul.f32 %v1114, %v1146
    %v1163 = vmul.f32 %v1115, %v1147
    %v1164 = vmul.f32 %v1116, %v1148
    %v1165 = vmul.f32 %v1117, %v1149
    %v1166 = vmul.f32 %v1118, %v1150
    %v1167 = vmul.f32 %v1119, %v1151
    %v1168 = vmul.f32 %v1120, %v1152
    %v1169 = vmul.f32 %v1121, %v1153
    %vm1170 = vcmp.eq.s32.totalorder %v223, 10
    %v1171 = vsel %vm1170, 1, 0
    %vm1172 = vcmp.eq.s32.totalorder %v1171, 1
    %v1173 = vsel %vm1172, %v1154, %v800
    %v1174 = vsel %vm1172, %v1155, %v801
    %v1175 = vsel %vm1172, %v1156, %v802
    %v1176 = vsel %vm1172, %v1157, %v803
    %v1177 = vsel %vm1172, %v1158, %v804
    %v1178 = vsel %vm1172, %v1159, %v805
    %v1179 = vsel %vm1172, %v1160, %v806
    %v1180 = vsel %vm1172, %v1161, %v807
    %v1181 = vsel %vm1172, %v1162, %v808
    %v1182 = vsel %vm1172, %v1163, %v809
    %v1183 = vsel %vm1172, %v1164, %v810
    %v1184 = vsel %vm1172, %v1165, %v811
    %v1185 = vsel %vm1172, %v1166, %v812
    %v1186 = vsel %vm1172, %v1167, %v813
    %v1187 = vsel %vm1172, %v1168, %v814
    %v1188 = vsel %vm1172, %v1169, %v815
    %1189 = vst [vmem:[#allocation2] sm:$0xff] %v1173
    %1190 = vst [vmem:[#allocation2 + $0x8] sm:$0xff] %v1174
    %1191 = vst [vmem:[#allocation2 + $0x10] sm:$0xff] %v1175
    %1192 = vst [vmem:[#allocation2 + $0x18] sm:$0xff] %v1176
    %1193 = vst [vmem:[#allocation2 + $0x20] sm:$0xff] %v1177
    %1194 = vst [vmem:[#allocation2 + $0x28] sm:$0xff] %v1178
    %1195 = vst [vmem:[#allocation2 + $0x30] sm:$0xff] %v1179
    %1196 = vst [vmem:[#allocation2 + $0x38] sm:$0xff] %v1180
    %1197 = vst [vmem:[#allocation2 + $0x40] sm:$0xff] %v1181
    %1198 = vst [vmem:[#allocation2 + $0x48] sm:$0xff] %v1182
    %1199 = vst [vmem:[#allocation2 + $0x50] sm:$0xff] %v1183
    %1200 = vst [vmem:[#allocation2 + $0x58] sm:$0xff] %v1184
    %1201 = vst [vmem:[#allocation2 + $0x60] sm:$0xff] %v1185
    %1202 = vst [vmem:[#allocation2 + $0x68] sm:$0xff] %v1186
    %1203 = vst [vmem:[#allocation2 + $0x70] sm:$0xff] %v1187
    %1204 = vst [vmem:[#allocation2 + $0x78] sm:$0xff] %v1188
    // Predicated region
    $region26: #{tpu_custom_call.1} parent=1 // pred_check
      _
    $region27: #{tpu_custom_call.1} parent=1 // pred_check_branch
      %1206 = sbr.rel (0) target = $region29
    $region28: #{tpu_custom_call.1} parent=1 // pred_region
      %1208 = vsyncadd [#allocation3], 0
      %s1209 = sshll.u32 [#allocation2], 4
      %s1210 = int_to_ptr.vmem [resolvable:$true] %s1209
      %s1211 = sshll.u32 %s6, 4
      %s1212 = int_to_ptr.hbm [resolvable:$true] %s1211
      %1217 = dma.vmem_to_hbm [thread:$0]  %s1210, 2048, %s1212, [#allocation3], 128, 128, 8
    $region29: #{tpu_custom_call.1} parent=1 // pred_fallthru
      _
    // Predicated region
    $region30: #{tpu_custom_call.1} parent=1 // pred_check
      _
    $region31: #{tpu_custom_call.1} parent=1 // pred_check_branch
      %1219 = sbr.rel (0) target = $region33
    $region32: #{tpu_custom_call.1} parent=1 // pred_region
      %1221 = dma.done [#allocation3], 2048
    $region33: #{tpu_custom_call.1} parent=1 // pred_fallthru
      _
    %1222 = vsyncpa [#allocation3], 1

</llo_original>
